<compile_context>
chip_gen: v6e
topology: v6e:2x2x1
jax: 0.10.0
libtpu: 0.0.40
codegen_flags: <defaults>
</compile_context>

<pallas_src>
import functools

import jax
import jax.numpy as jnp
from jax.experimental import pallas as pl
from jax.experimental.pallas import tpu as pltpu

EPS = 1e-5


def _conv_taps(x_ref, w_ref, offsets, py):
    """y (C_out, py) f32 = sum_t  w_ref[t] (C_out, C_in) @ x_ref[0, :, off_t:off_t+py].

    x_ref holds one image's zero-padded, flattened-spatial slab with a margin on
    both ends, so every tap is a static lane-offset slice (stays in VMEM).
    """
    y = jnp.dot(w_ref[0], x_ref[0, :, pl.ds(offsets[0], py)],
                preferred_element_type=jnp.float32)
    for t in range(1, len(offsets)):
        y = y + jnp.dot(w_ref[t], x_ref[0, :, pl.ds(offsets[t], py)],
                        preferred_element_type=jnp.float32)
    return y


def _stats_kernel(x_ref, w_ref, mask_ref, sum_ref, sumsq_ref, *, offsets, py):
    # x_ref: (1, C_in, L) bf16   w_ref: (9, C_out, C_in) bf16   mask_ref: (1, py) f32
    # sum_ref / sumsq_ref: (1, C_out, 1) f32 — per-image partials (batch-parallel).
    y = _conv_taps(x_ref, w_ref, offsets, py)          # (C_out, py) f32
    ym = y * mask_ref[...]                             # zero padding-ring / lane-pad cols
    sum_ref[0] = jnp.sum(ym, axis=1, keepdims=True)
    sumsq_ref[0] = jnp.sum(ym * y, axis=1, keepdims=True)


def _norm_kernel(x_ref, w_ref, scale_ref, shift_ref, out_ref, *, offsets, py):
    # scale_ref / shift_ref: (C_out, 1) f32 folded BN affine.  out_ref: (1, C_out, py) f32.
    y = _conv_taps(x_ref, w_ref, offsets, py)
    out_ref[0] = jnp.maximum(y * scale_ref[...] + shift_ref[...], 0.0)


def _round_up(v, m):
    return ((v + m - 1) // m) * m


@functools.partial(jax.jit, static_argnames=("k_size", "pad"))
def conv_bn_relu_forward(x, weight, bias, gamma, beta, k_size=3, pad=1):
    """x: (N, C_in, H, W) f32. weight: (C_out, C_in, k, k). Returns NCHW f32.

    `bias` is accepted for signature parity with nn.Conv2d but unused: a per-channel
    constant added before training-mode BatchNorm is cancelled by the mean subtraction.
    """
    del bias
    n, c_in, h, w = x.shape
    c_out = weight.shape[0]
    kk = k_size * k_size
    if 2 * pad != k_size - 1:
        raise NotImplementedError("only 'same' convolutions (2*pad == k_size-1) supported")

    hp, wp = h + 2 * pad, w + 2 * pad
    p_flat = hp * wp                        # padded-image flat spatial size
    py = _round_up(p_flat, 128)             # lane-padded output width
    margin = pad * (wp + 1)                 # max |tap offset| along the flat axis
    l_ext = _round_up(2 * margin + py, 128)

    c_in_p = _round_up(c_in, 8)
    c_out_p = _round_up(c_out, 8)

    # ---- kernel-friendly layouts (one cheap XLA pass over x; no im2col) --------
    xpad = jnp.pad(x, ((0, 0), (0, c_in_p - c_in), (pad, pad), (pad, pad)))
    x_ext = jnp.pad(xpad.reshape(n, c_in_p, p_flat).astype(jnp.bfloat16),
                    ((0, 0), (0, 0), (margin, l_ext - margin - p_flat)))

    w9 = jnp.transpose(weight, (2, 3, 0, 1)).reshape(kk, c_out, c_in)   # tap-major
    w9 = jnp.pad(w9, ((0, 0), (0, c_out_p - c_out), (0, c_in_p - c_in))).astype(jnp.bfloat16)

    idx = jnp.arange(py)
    rr, cc = idx // wp, idx % wp
    interior = ((rr >= pad) & (rr < pad + h) & (cc >= pad) & (cc < pad + w)
                & (idx < p_flat))
    mask = interior.astype(jnp.float32).reshape(1, py)

    # Static tap offsets into the margin-extended flat axis: tap (kh, kw) for output
    # flat position i reads x_ext[margin + (kh-pad)*wp + (kw-pad) + i].
    offsets = tuple(margin + (kh - pad) * wp + (kw - pad)
                    for kh in range(k_size) for kw in range(k_size))

    # Generation-safe VMEM budget from the actual footprint (cap 48 MiB for v7x).
    foot = (2 * c_in_p * l_ext * 2 + 2 * c_out_p * py * 4
            + kk * c_out_p * c_in_p * 2 + 3 * c_out_p * py * 4 + c_in_p * py * 2)
    vmem_limit = int(min(max(2 * foot, 32 * 1024 * 1024), 48 * 1024 * 1024))
    cparams = pltpu.CompilerParams(dimension_semantics=("parallel",),
                                   vmem_limit_bytes=vmem_limit)

    x_spec = pl.BlockSpec((1, c_in_p, l_ext), lambda i: (i, 0, 0))          # streamed
    w_spec = pl.BlockSpec((kk, c_out_p, c_in_p), lambda i: (0, 0, 0))       # resident

    # ---- pass 1: per-image per-channel sum / sum-of-squares (batch-parallel) ---
    stats_kernel = functools.partial(_stats_kernel, offsets=offsets, py=py)
    sum_p, sumsq_p = pl.pallas_call(
        stats_kernel,
        out_shape=(jax.ShapeDtypeStruct((n, c_out_p, 1), jnp.float32),
                   jax.ShapeDtypeStruct((n, c_out_p, 1), jnp.float32)),
        grid_spec=pltpu.PrefetchScalarGridSpec(
            num_scalar_prefetch=0,
            grid=(n,),
            in_specs=[x_spec, w_spec, pl.BlockSpec((1, py), lambda i: (0, 0))],
            out_specs=(pl.BlockSpec((1, c_out_p, 1), lambda i: (i, 0, 0)),
                       pl.BlockSpec((1, c_out_p, 1), lambda i: (i, 0, 0)))),
        compiler_params=cparams,
    )(x_ext, w9, mask)

    # ---- tiny XLA combine: fold BN affine into per-channel scale / shift -------
    inv_count = 1.0 / float(n * h * w)
    mean = jnp.sum(sum_p[:, :, 0], axis=0) * inv_count
    var = jnp.maximum(jnp.sum(sumsq_p[:, :, 0], axis=0) * inv_count - mean * mean, 0.0)
    gamma_p = jnp.pad(gamma.astype(jnp.float32), (0, c_out_p - c_out))
    beta_p = jnp.pad(beta.astype(jnp.float32), (0, c_out_p - c_out))
    scale = gamma_p * jax.lax.rsqrt(var + EPS)
    shift = (beta_p - mean * scale).reshape(c_out_p, 1)
    scale = scale.reshape(c_out_p, 1)

    # ---- pass 2: recompute conv (cheap: raw x, not patches), BN affine + ReLU ---
    norm_kernel = functools.partial(_norm_kernel, offsets=offsets, py=py)
    out_p = pl.pallas_call(
        norm_kernel,
        out_shape=jax.ShapeDtypeStruct((n, c_out_p, py), jnp.float32),
        grid_spec=pltpu.PrefetchScalarGridSpec(
            num_scalar_prefetch=0,
            grid=(n,),
            in_specs=[x_spec, w_spec,
                      pl.BlockSpec((c_out_p, 1), lambda i: (0, 0)),
                      pl.BlockSpec((c_out_p, 1), lambda i: (0, 0))],
            out_specs=pl.BlockSpec((1, c_out_p, py), lambda i: (i, 0, 0))),
        compiler_params=cparams,
    )(x_ext, w9, scale, shift)

    # (N, C_out_p, py) is already NCHW-major: just strip channel/lane padding and
    # the spatial padding ring — no HBM transpose.
    out = out_p[:, :c_out, :p_flat].reshape(n, c_out, hp, wp)
    return out[:, :, pad:pad + h, pad:pad + w]


def _reference_forward(x, weight, bias, gamma, beta, k_size, pad, eps=EPS):
    # Pure-JAX reference: bf16 conv (f32 accumulation) + bias, training-mode BN, ReLU.
    y = jax.lax.conv_general_dilated(
        x.astype(jnp.bfloat16), weight.astype(jnp.bfloat16),
        window_strides=(1, 1), padding=((pad, pad), (pad, pad)),
        dimension_numbers=("NCHW", "OIHW", "NCHW"),
        preferred_element_type=jnp.float32)
    y = y + bias[None, :, None, None]
    mean = jnp.mean(y, axis=(0, 2, 3), keepdims=True)
    var = jnp.mean((y - mean) ** 2, axis=(0, 2, 3), keepdims=True)
    yhat = (y - mean) * jax.lax.rsqrt(var + eps)
    return jnp.maximum(gamma[None, :, None, None] * yhat + beta[None, :, None, None], 0.0)


if __name__ == "__main__":
    key = jax.random.PRNGKey(0)
    k_x, k_w, k_b, k_g, k_bt = jax.random.split(key, 5)

    N, C_IN, C_OUT, H, W, K, PAD = 2, 4, 8, 16, 16, 3, 1

    x = jax.random.normal(k_x, (N, C_IN, H, W), dtype=jnp.float32)

    # Deterministic parameters (shapes from nn.Conv2d / nn.BatchNorm2d).
    fan_in = C_IN * K * K
    bound = 1.0 / (fan_in ** 0.5)
    weight = jax.random.uniform(k_w, (C_OUT, C_IN, K, K), jnp.float32, -bound, bound)
    bias = jax.random.uniform(k_b, (C_OUT,), jnp.float32, -bound, bound)
    # Module init is gamma=1, beta=0; random values exercise the folded affine path.
    gamma = jax.random.uniform(k_g, (C_OUT,), jnp.float32, 0.5, 1.5)
    beta = jax.random.normal(k_bt, (C_OUT,), jnp.float32) * 0.1

    out = conv_bn_relu_forward(x, weight, bias, gamma, beta, k_size=K, pad=PAD)
    jax.block_until_ready(out)
    assert out.shape == (N, C_OUT, H, W), out.shape

    ref = _reference_forward(x, weight, bias, gamma, beta, K, PAD)
    max_err = float(jnp.max(jnp.abs(out - ref)))
    assert max_err < 1e-2, f"max abs err {max_err}"
    print("KERNEL_OK")
</pallas_src>

<mosaic_0001>
module attributes {stable_mosaic.version = 11 : i64} {
  func.func @_stats_kernel(%arg0: i32, %arg1: memref<1x8x512xbf16, #tpu.memory_space<vmem>>, %arg2: memref<9x8x8xbf16, #tpu.memory_space<vmem>>, %arg3: memref<1x384xf32, #tpu.memory_space<vmem>>, %arg4: memref<1x8x1xf32, #tpu.memory_space<vmem>>, %arg5: memref<1x8x1xf32, #tpu.memory_space<vmem>>) attributes {dimension_semantics = [#tpu.dimension_semantics<parallel>], iteration_bounds = array<i64: 2>, scalar_prefetch = 0 : i64, scratch_operands = 0 : i64, tpu.core_type = #tpu.core_type<tc>, window_params = [{transform_indices = @transform_0, window_bounds = array<i64: 1, 8, 512>}, {pipeline_mode = #tpu.pipeline_mode<synchronous>, transform_indices = @transform_1, window_bounds = array<i64: 9, 8, 8>}, {pipeline_mode = #tpu.pipeline_mode<synchronous>, transform_indices = @transform_2, window_bounds = array<i64: 1, 384>}, {transform_indices = @transform_3, window_bounds = array<i64: 1, 8, 1>}, {transform_indices = @transform_4, window_bounds = array<i64: 1, 8, 1>}]} {
    %c0 = arith.constant 0 : index
    %c0_0 = arith.constant 0 : index
    %c0_1 = arith.constant 0 : index
    %0 = vector.load %arg2[%c0, %c0_0, %c0_1] : memref<9x8x8xbf16, #tpu.memory_space<vmem>>, vector<1x8x8xbf16>
    %1 = vector.shape_cast %0 : vector<1x8x8xbf16> to vector<8x8xbf16>
    %c0_2 = arith.constant 0 : index
    %c0_3 = arith.constant 0 : index
    %c0_4 = arith.constant 0 : index
    %2 = vector.load %arg1[%c0_2, %c0_3, %c0_4] : memref<1x8x512xbf16, #tpu.memory_space<vmem>>, vector<1x8x384xbf16>
    %3 = vector.shape_cast %2 : vector<1x8x384xbf16> to vector<8x384xbf16>
    %cst = arith.constant dense<0.000000e+00> : vector<8x384xf32>
    %4 = tpu.matmul %1, %3, %cst {dimension_numbers = #tpu.dot_dimension_numbers<[1], [0], [0], [1], [0, 0, 1, 1], [], []>} : vector<8x8xbf16>, vector<8x384xbf16>, vector<8x384xf32> -> vector<8x384xf32>
    %c1 = arith.constant 1 : index
    %c0_5 = arith.constant 0 : index
    %c0_6 = arith.constant 0 : index
    %5 = vector.load %arg2[%c1, %c0_5, %c0_6] : memref<9x8x8xbf16, #tpu.memory_space<vmem>>, vector<1x8x8xbf16>
    %6 = vector.shape_cast %5 : vector<1x8x8xbf16> to vector<8x8xbf16>
    %c0_7 = arith.constant 0 : index
    %c0_8 = arith.constant 0 : index
    %c1_9 = arith.constant 1 : index
    %7 = vector.load %arg1[%c0_7, %c0_8, %c1_9] : memref<1x8x512xbf16, #tpu.memory_space<vmem>>, vector<1x8x384xbf16>
    %8 = vector.shape_cast %7 : vector<1x8x384xbf16> to vector<8x384xbf16>
    %cst_10 = arith.constant dense<0.000000e+00> : vector<8x384xf32>
    %9 = tpu.matmul %6, %8, %cst_10 {dimension_numbers = #tpu.dot_dimension_numbers<[1], [0], [0], [1], [0, 0, 1, 1], [], []>} : vector<8x8xbf16>, vector<8x384xbf16>, vector<8x384xf32> -> vector<8x384xf32>
    %10 = arith.addf %4, %9 : vector<8x384xf32>
    %c2 = arith.constant 2 : index
    %c0_11 = arith.constant 0 : index
    %c0_12 = arith.constant 0 : index
    %11 = vector.load %arg2[%c2, %c0_11, %c0_12] : memref<9x8x8xbf16, #tpu.memory_space<vmem>>, vector<1x8x8xbf16>
    %12 = vector.shape_cast %11 : vector<1x8x8xbf16> to vector<8x8xbf16>
    %c0_13 = arith.constant 0 : index
    %c0_14 = arith.constant 0 : index
    %c2_15 = arith.constant 2 : index
    %13 = vector.load %arg1[%c0_13, %c0_14, %c2_15] : memref<1x8x512xbf16, #tpu.memory_space<vmem>>, vector<1x8x384xbf16>
    %14 = vector.shape_cast %13 : vector<1x8x384xbf16> to vector<8x384xbf16>
    %cst_16 = arith.constant dense<0.000000e+00> : vector<8x384xf32>
    %15 = tpu.matmul %12, %14, %cst_16 {dimension_numbers = #tpu.dot_dimension_numbers<[1], [0], [0], [1], [0, 0, 1, 1], [], []>} : vector<8x8xbf16>, vector<8x384xbf16>, vector<8x384xf32> -> vector<8x384xf32>
    %16 = arith.addf %10, %15 : vector<8x384xf32>
    %c3 = arith.constant 3 : index
    %c0_17 = arith.constant 0 : index
    %c0_18 = arith.constant 0 : index
    %17 = vector.load %arg2[%c3, %c0_17, %c0_18] : memref<9x8x8xbf16, #tpu.memory_space<vmem>>, vector<1x8x8xbf16>
    %18 = vector.shape_cast %17 : vector<1x8x8xbf16> to vector<8x8xbf16>
    %c0_19 = arith.constant 0 : index
    %c0_20 = arith.constant 0 : index
    %c18 = arith.constant 18 : index
    %19 = vector.load %arg1[%c0_19, %c0_20, %c18] : memref<1x8x512xbf16, #tpu.memory_space<vmem>>, vector<1x8x384xbf16>
    %20 = vector.shape_cast %19 : vector<1x8x384xbf16> to vector<8x384xbf16>
    %cst_21 = arith.constant dense<0.000000e+00> : vector<8x384xf32>
    %21 = tpu.matmul %18, %20, %cst_21 {dimension_numbers = #tpu.dot_dimension_numbers<[1], [0], [0], [1], [0, 0, 1, 1], [], []>} : vector<8x8xbf16>, vector<8x384xbf16>, vector<8x384xf32> -> vector<8x384xf32>
    %22 = arith.addf %16, %21 : vector<8x384xf32>
    %c4 = arith.constant 4 : index
    %c0_22 = arith.constant 0 : index
    %c0_23 = arith.constant 0 : index
    %23 = vector.load %arg2[%c4, %c0_22, %c0_23] : memref<9x8x8xbf16, #tpu.memory_space<vmem>>, vector<1x8x8xbf16>
    %24 = vector.shape_cast %23 : vector<1x8x8xbf16> to vector<8x8xbf16>
    %c0_24 = arith.constant 0 : index
    %c0_25 = arith.constant 0 : index
    %c19 = arith.constant 19 : index
    %25 = vector.load %arg1[%c0_24, %c0_25, %c19] : memref<1x8x512xbf16, #tpu.memory_space<vmem>>, vector<1x8x384xbf16>
    %26 = vector.shape_cast %25 : vector<1x8x384xbf16> to vector<8x384xbf16>
    %cst_26 = arith.constant dense<0.000000e+00> : vector<8x384xf32>
    %27 = tpu.matmul %24, %26, %cst_26 {dimension_numbers = #tpu.dot_dimension_numbers<[1], [0], [0], [1], [0, 0, 1, 1], [], []>} : vector<8x8xbf16>, vector<8x384xbf16>, vector<8x384xf32> -> vector<8x384xf32>
    %28 = arith.addf %22, %27 : vector<8x384xf32>
    %c5 = arith.constant 5 : index
    %c0_27 = arith.constant 0 : index
    %c0_28 = arith.constant 0 : index
    %29 = vector.load %arg2[%c5, %c0_27, %c0_28] : memref<9x8x8xbf16, #tpu.memory_space<vmem>>, vector<1x8x8xbf16>
    %30 = vector.shape_cast %29 : vector<1x8x8xbf16> to vector<8x8xbf16>
    %c0_29 = arith.constant 0 : index
    %c0_30 = arith.constant 0 : index
    %c20 = arith.constant 20 : index
    %31 = vector.load %arg1[%c0_29, %c0_30, %c20] : memref<1x8x512xbf16, #tpu.memory_space<vmem>>, vector<1x8x384xbf16>
    %32 = vector.shape_cast %31 : vector<1x8x384xbf16> to vector<8x384xbf16>
    %cst_31 = arith.constant dense<0.000000e+00> : vector<8x384xf32>
    %33 = tpu.matmul %30, %32, %cst_31 {dimension_numbers = #tpu.dot_dimension_numbers<[1], [0], [0], [1], [0, 0, 1, 1], [], []>} : vector<8x8xbf16>, vector<8x384xbf16>, vector<8x384xf32> -> vector<8x384xf32>
    %34 = arith.addf %28, %33 : vector<8x384xf32>
    %c6 = arith.constant 6 : index
    %c0_32 = arith.constant 0 : index
    %c0_33 = arith.constant 0 : index
    %35 = vector.load %arg2[%c6, %c0_32, %c0_33] : memref<9x8x8xbf16, #tpu.memory_space<vmem>>, vector<1x8x8xbf16>
    %36 = vector.shape_cast %35 : vector<1x8x8xbf16> to vector<8x8xbf16>
    %c0_34 = arith.constant 0 : index
    %c0_35 = arith.constant 0 : index
    %c36 = arith.constant 36 : index
    %37 = vector.load %arg1[%c0_34, %c0_35, %c36] : memref<1x8x512xbf16, #tpu.memory_space<vmem>>, vector<1x8x384xbf16>
    %38 = vector.shape_cast %37 : vector<1x8x384xbf16> to vector<8x384xbf16>
    %cst_36 = arith.constant dense<0.000000e+00> : vector<8x384xf32>
    %39 = tpu.matmul %36, %38, %cst_36 {dimension_numbers = #tpu.dot_dimension_numbers<[1], [0], [0], [1], [0, 0, 1, 1], [], []>} : vector<8x8xbf16>, vector<8x384xbf16>, vector<8x384xf32> -> vector<8x384xf32>
    %40 = arith.addf %34, %39 : vector<8x384xf32>
    %c7 = arith.constant 7 : index
    %c0_37 = arith.constant 0 : index
    %c0_38 = arith.constant 0 : index
    %41 = vector.load %arg2[%c7, %c0_37, %c0_38] : memref<9x8x8xbf16, #tpu.memory_space<vmem>>, vector<1x8x8xbf16>
    %42 = vector.shape_cast %41 : vector<1x8x8xbf16> to vector<8x8xbf16>
    %c0_39 = arith.constant 0 : index
    %c0_40 = arith.constant 0 : index
    %c37 = arith.constant 37 : index
    %43 = vector.load %arg1[%c0_39, %c0_40, %c37] : memref<1x8x512xbf16, #tpu.memory_space<vmem>>, vector<1x8x384xbf16>
    %44 = vector.shape_cast %43 : vector<1x8x384xbf16> to vector<8x384xbf16>
    %cst_41 = arith.constant dense<0.000000e+00> : vector<8x384xf32>
    %45 = tpu.matmul %42, %44, %cst_41 {dimension_numbers = #tpu.dot_dimension_numbers<[1], [0], [0], [1], [0, 0, 1, 1], [], []>} : vector<8x8xbf16>, vector<8x384xbf16>, vector<8x384xf32> -> vector<8x384xf32>
    %46 = arith.addf %40, %45 : vector<8x384xf32>
    %c8 = arith.constant 8 : index
    %c0_42 = arith.constant 0 : index
    %c0_43 = arith.constant 0 : index
    %47 = vector.load %arg2[%c8, %c0_42, %c0_43] : memref<9x8x8xbf16, #tpu.memory_space<vmem>>, vector<1x8x8xbf16>
    %48 = vector.shape_cast %47 : vector<1x8x8xbf16> to vector<8x8xbf16>
    %c0_44 = arith.constant 0 : index
    %c0_45 = arith.constant 0 : index
    %c38 = arith.constant 38 : index
    %49 = vector.load %arg1[%c0_44, %c0_45, %c38] : memref<1x8x512xbf16, #tpu.memory_space<vmem>>, vector<1x8x384xbf16>
    %50 = vector.shape_cast %49 : vector<1x8x384xbf16> to vector<8x384xbf16>
    %cst_46 = arith.constant dense<0.000000e+00> : vector<8x384xf32>
    %51 = tpu.matmul %48, %50, %cst_46 {dimension_numbers = #tpu.dot_dimension_numbers<[1], [0], [0], [1], [0, 0, 1, 1], [], []>} : vector<8x8xbf16>, vector<8x384xbf16>, vector<8x384xf32> -> vector<8x384xf32>
    %52 = arith.addf %46, %51 : vector<8x384xf32>
    %c0_47 = arith.constant 0 : index
    %c0_48 = arith.constant 0 : index
    %53 = vector.load %arg3[%c0_47, %c0_48] : memref<1x384xf32, #tpu.memory_space<vmem>>, vector<1x384xf32>
    %54 = vector.broadcast %53 : vector<1x384xf32> to vector<8x384xf32>
    %55 = arith.mulf %52, %54 : vector<8x384xf32>
    %cst_49 = arith.constant dense<0.000000e+00> : vector<8xf32>
    %56 = vector.multi_reduction <add>, %55, %cst_49 [1] : vector<8x384xf32> to vector<8xf32>
    %57 = vector.shape_cast %56 : vector<8xf32> to vector<8x1xf32>
    %c0_50 = arith.constant 0 : index
    %c0_51 = arith.constant 0 : index
    %c0_52 = arith.constant 0 : index
    %58 = vector.load %arg4[%c0_50, %c0_51, %c0_52] : memref<1x8x1xf32, #tpu.memory_space<vmem>>, vector<1x8x1xf32>
    %59 = vector.shape_cast %58 : vector<1x8x1xf32> to vector<8x1xf32>
    %60 = vector.shape_cast %57 : vector<8x1xf32> to vector<1x8x1xf32>
    tpu.vector_store %arg4[%c0_50, %c0_51, %c0_52], %60 {strides = array<i32>} : memref<1x8x1xf32, #tpu.memory_space<vmem>>, vector<1x8x1xf32>,
    %61 = arith.mulf %55, %52 : vector<8x384xf32>
    %cst_53 = arith.constant dense<0.000000e+00> : vector<8xf32>
    %62 = vector.multi_reduction <add>, %61, %cst_53 [1] : vector<8x384xf32> to vector<8xf32>
    %63 = vector.shape_cast %62 : vector<8xf32> to vector<8x1xf32>
    %c0_54 = arith.constant 0 : index
    %c0_55 = arith.constant 0 : index
    %c0_56 = arith.constant 0 : index
    %64 = vector.load %arg5[%c0_54, %c0_55, %c0_56] : memref<1x8x1xf32, #tpu.memory_space<vmem>>, vector<1x8x1xf32>
    %65 = vector.shape_cast %64 : vector<1x8x1xf32> to vector<8x1xf32>
    %66 = vector.shape_cast %63 : vector<8x1xf32> to vector<1x8x1xf32>
    tpu.vector_store %arg5[%c0_54, %c0_55, %c0_56], %66 {strides = array<i32>} : memref<1x8x1xf32, #tpu.memory_space<vmem>>, vector<1x8x1xf32>,
    return
  }
  func.func @transform_0(%arg0: i32) -> (i32, i32, i32) {
    %c0_i32 = arith.constant 0 : i32
    %c0_i32_0 = arith.constant 0 : i32
    %c0_i32_1 = arith.constant 0 : i32
    return %arg0, %c0_i32, %c0_i32_0 : i32, i32, i32
  }
  func.func @transform_1(%arg0: i32) -> (i32, i32, i32) {
    %c0_i32 = arith.constant 0 : i32
    %c0_i32_0 = arith.constant 0 : i32
    %c0_i32_1 = arith.constant 0 : i32
    %c0_i32_2 = arith.constant 0 : i32
    return %c0_i32, %c0_i32_0, %c0_i32_1 : i32, i32, i32
  }
  func.func @transform_2(%arg0: i32) -> (i32, i32) {
    %c0_i32 = arith.constant 0 : i32
    %c0_i32_0 = arith.constant 0 : i32
    %c0_i32_1 = arith.constant 0 : i32
    return %c0_i32, %c0_i32_0 : i32, i32
  }
  func.func @transform_3(%arg0: i32) -> (i32, i32, i32) {
    %c0_i32 = arith.constant 0 : i32
    %c0_i32_0 = arith.constant 0 : i32
    %c0_i32_1 = arith.constant 0 : i32
    return %arg0, %c0_i32, %c0_i32_0 : i32, i32, i32
  }
  func.func @transform_4(%arg0: i32) -> (i32, i32, i32) {
    %c0_i32 = arith.constant 0 : i32
    %c0_i32_0 = arith.constant 0 : i32
    %c0_i32_1 = arith.constant 0 : i32
    return %arg0, %c0_i32, %c0_i32_0 : i32, i32, i32
  }
}

module attributes {stable_mosaic.version = 11 : i64} {
  func.func @_norm_kernel(%arg0: i32, %arg1: memref<1x8x512xbf16, #tpu.memory_space<vmem>>, %arg2: memref<9x8x8xbf16, #tpu.memory_space<vmem>>, %arg3: memref<8x1xf32, #tpu.memory_space<vmem>>, %arg4: memref<8x1xf32, #tpu.memory_space<vmem>>, %arg5: memref<1x8x384xf32, #tpu.memory_space<vmem>>) attributes {dimension_semantics = [#tpu.dimension_semantics<parallel>], iteration_bounds = array<i64: 2>, scalar_prefetch = 0 : i64, scratch_operands = 0 : i64, tpu.core_type = #tpu.core_type<tc>, window_params = [{transform_indices = @transform_0, window_bounds = array<i64: 1, 8, 512>}, {pipeline_mode = #tpu.pipeline_mode<synchronous>, transform_indices = @transform_1, window_bounds = array<i64: 9, 8, 8>}, {pipeline_mode = #tpu.pipeline_mode<synchronous>, transform_indices = @transform_2, window_bounds = array<i64: 8, 1>}, {pipeline_mode = #tpu.pipeline_mode<synchronous>, transform_indices = @transform_3, window_bounds = array<i64: 8, 1>}, {transform_indices = @transform_4, window_bounds = array<i64: 1, 8, 384>}]} {
    %c0 = arith.constant 0 : index
    %c0_0 = arith.constant 0 : index
    %c0_1 = arith.constant 0 : index
    %0 = vector.load %arg2[%c0, %c0_0, %c0_1] : memref<9x8x8xbf16, #tpu.memory_space<vmem>>, vector<1x8x8xbf16>
    %1 = vector.shape_cast %0 : vector<1x8x8xbf16> to vector<8x8xbf16>
    %c0_2 = arith.constant 0 : index
    %c0_3 = arith.constant 0 : index
    %c0_4 = arith.constant 0 : index
    %2 = vector.load %arg1[%c0_2, %c0_3, %c0_4] : memref<1x8x512xbf16, #tpu.memory_space<vmem>>, vector<1x8x384xbf16>
    %3 = vector.shape_cast %2 : vector<1x8x384xbf16> to vector<8x384xbf16>
    %cst = arith.constant dense<0.000000e+00> : vector<8x384xf32>
    %4 = tpu.matmul %1, %3, %cst {dimension_numbers = #tpu.dot_dimension_numbers<[1], [0], [0], [1], [0, 0, 1, 1], [], []>} : vector<8x8xbf16>, vector<8x384xbf16>, vector<8x384xf32> -> vector<8x384xf32>
    %c1 = arith.constant 1 : index
    %c0_5 = arith.constant 0 : index
    %c0_6 = arith.constant 0 : index
    %5 = vector.load %arg2[%c1, %c0_5, %c0_6] : memref<9x8x8xbf16, #tpu.memory_space<vmem>>, vector<1x8x8xbf16>
    %6 = vector.shape_cast %5 : vector<1x8x8xbf16> to vector<8x8xbf16>
    %c0_7 = arith.constant 0 : index
    %c0_8 = arith.constant 0 : index
    %c1_9 = arith.constant 1 : index
    %7 = vector.load %arg1[%c0_7, %c0_8, %c1_9] : memref<1x8x512xbf16, #tpu.memory_space<vmem>>, vector<1x8x384xbf16>
    %8 = vector.shape_cast %7 : vector<1x8x384xbf16> to vector<8x384xbf16>
    %cst_10 = arith.constant dense<0.000000e+00> : vector<8x384xf32>
    %9 = tpu.matmul %6, %8, %cst_10 {dimension_numbers = #tpu.dot_dimension_numbers<[1], [0], [0], [1], [0, 0, 1, 1], [], []>} : vector<8x8xbf16>, vector<8x384xbf16>, vector<8x384xf32> -> vector<8x384xf32>
    %10 = arith.addf %4, %9 : vector<8x384xf32>
    %c2 = arith.constant 2 : index
    %c0_11 = arith.constant 0 : index
    %c0_12 = arith.constant 0 : index
    %11 = vector.load %arg2[%c2, %c0_11, %c0_12] : memref<9x8x8xbf16, #tpu.memory_space<vmem>>, vector<1x8x8xbf16>
    %12 = vector.shape_cast %11 : vector<1x8x8xbf16> to vector<8x8xbf16>
    %c0_13 = arith.constant 0 : index
    %c0_14 = arith.constant 0 : index
    %c2_15 = arith.constant 2 : index
    %13 = vector.load %arg1[%c0_13, %c0_14, %c2_15] : memref<1x8x512xbf16, #tpu.memory_space<vmem>>, vector<1x8x384xbf16>
    %14 = vector.shape_cast %13 : vector<1x8x384xbf16> to vector<8x384xbf16>
    %cst_16 = arith.constant dense<0.000000e+00> : vector<8x384xf32>
    %15 = tpu.matmul %12, %14, %cst_16 {dimension_numbers = #tpu.dot_dimension_numbers<[1], [0], [0], [1], [0, 0, 1, 1], [], []>} : vector<8x8xbf16>, vector<8x384xbf16>, vector<8x384xf32> -> vector<8x384xf32>
    %16 = arith.addf %10, %15 : vector<8x384xf32>
    %c3 = arith.constant 3 : index
    %c0_17 = arith.constant 0 : index
    %c0_18 = arith.constant 0 : index
    %17 = vector.load %arg2[%c3, %c0_17, %c0_18] : memref<9x8x8xbf16, #tpu.memory_space<vmem>>, vector<1x8x8xbf16>
    %18 = vector.shape_cast %17 : vector<1x8x8xbf16> to vector<8x8xbf16>
    %c0_19 = arith.constant 0 : index
    %c0_20 = arith.constant 0 : index
    %c18 = arith.constant 18 : index
    %19 = vector.load %arg1[%c0_19, %c0_20, %c18] : memref<1x8x512xbf16, #tpu.memory_space<vmem>>, vector<1x8x384xbf16>
    %20 = vector.shape_cast %19 : vector<1x8x384xbf16> to vector<8x384xbf16>
    %cst_21 = arith.constant dense<0.000000e+00> : vector<8x384xf32>
    %21 = tpu.matmul %18, %20, %cst_21 {dimension_numbers = #tpu.dot_dimension_numbers<[1], [0], [0], [1], [0, 0, 1, 1], [], []>} : vector<8x8xbf16>, vector<8x384xbf16>, vector<8x384xf32> -> vector<8x384xf32>
    %22 = arith.addf %16, %21 : vector<8x384xf32>
    %c4 = arith.constant 4 : index
    %c0_22 = arith.constant 0 : index
    %c0_23 = arith.constant 0 : index
    %23 = vector.load %arg2[%c4, %c0_22, %c0_23] : memref<9x8x8xbf16, #tpu.memory_space<vmem>>, vector<1x8x8xbf16>
    %24 = vector.shape_cast %23 : vector<1x8x8xbf16> to vector<8x8xbf16>
    %c0_24 = arith.constant 0 : index
    %c0_25 = arith.constant 0 : index
    %c19 = arith.constant 19 : index
    %25 = vector.load %arg1[%c0_24, %c0_25, %c19] : memref<1x8x512xbf16, #tpu.memory_space<vmem>>, vector<1x8x384xbf16>
    %26 = vector.shape_cast %25 : vector<1x8x384xbf16> to vector<8x384xbf16>
    %cst_26 = arith.constant dense<0.000000e+00> : vector<8x384xf32>
    %27 = tpu.matmul %24, %26, %cst_26 {dimension_numbers = #tpu.dot_dimension_numbers<[1], [0], [0], [1], [0, 0, 1, 1], [], []>} : vector<8x8xbf16>, vector<8x384xbf16>, vector<8x384xf32> -> vector<8x384xf32>
    %28 = arith.addf %22, %27 : vector<8x384xf32>
    %c5 = arith.constant 5 : index
    %c0_27 = arith.constant 0 : index
    %c0_28 = arith.constant 0 : index
    %29 = vector.load %arg2[%c5, %c0_27, %c0_28] : memref<9x8x8xbf16, #tpu.memory_space<vmem>>, vector<1x8x8xbf16>
    %30 = vector.shape_cast %29 : vector<1x8x8xbf16> to vector<8x8xbf16>
    %c0_29 = arith.constant 0 : index
    %c0_30 = arith.constant 0 : index
    %c20 = arith.constant 20 : index
    %31 = vector.load %arg1[%c0_29, %c0_30, %c20] : memref<1x8x512xbf16, #tpu.memory_space<vmem>>, vector<1x8x384xbf16>
    %32 = vector.shape_cast %31 : vector<1x8x384xbf16> to vector<8x384xbf16>
    %cst_31 = arith.constant dense<0.000000e+00> : vector<8x384xf32>
    %33 = tpu.matmul %30, %32, %cst_31 {dimension_numbers = #tpu.dot_dimension_numbers<[1], [0], [0], [1], [0, 0, 1, 1], [], []>} : vector<8x8xbf16>, vector<8x384xbf16>, vector<8x384xf32> -> vector<8x384xf32>
    %34 = arith.addf %28, %33 : vector<8x384xf32>
    %c6 = arith.constant 6 : index
    %c0_32 = arith.constant 0 : index
    %c0_33 = arith.constant 0 : index
    %35 = vector.load %arg2[%c6, %c0_32, %c0_33] : memref<9x8x8xbf16, #tpu.memory_space<vmem>>, vector<1x8x8xbf16>
    %36 = vector.shape_cast %35 : vector<1x8x8xbf16> to vector<8x8xbf16>
    %c0_34 = arith.constant 0 : index
    %c0_35 = arith.constant 0 : index
    %c36 = arith.constant 36 : index
    %37 = vector.load %arg1[%c0_34, %c0_35, %c36] : memref<1x8x512xbf16, #tpu.memory_space<vmem>>, vector<1x8x384xbf16>
    %38 = vector.shape_cast %37 : vector<1x8x384xbf16> to vector<8x384xbf16>
    %cst_36 = arith.constant dense<0.000000e+00> : vector<8x384xf32>
    %39 = tpu.matmul %36, %38, %cst_36 {dimension_numbers = #tpu.dot_dimension_numbers<[1], [0], [0], [1], [0, 0, 1, 1], [], []>} : vector<8x8xbf16>, vector<8x384xbf16>, vector<8x384xf32> -> vector<8x384xf32>
    %40 = arith.addf %34, %39 : vector<8x384xf32>
    %c7 = arith.constant 7 : index
    %c0_37 = arith.constant 0 : index
    %c0_38 = arith.constant 0 : index
    %41 = vector.load %arg2[%c7, %c0_37, %c0_38] : memref<9x8x8xbf16, #tpu.memory_space<vmem>>, vector<1x8x8xbf16>
    %42 = vector.shape_cast %41 : vector<1x8x8xbf16> to vector<8x8xbf16>
    %c0_39 = arith.constant 0 : index
    %c0_40 = arith.constant 0 : index
    %c37 = arith.constant 37 : index
    %43 = vector.load %arg1[%c0_39, %c0_40, %c37] : memref<1x8x512xbf16, #tpu.memory_space<vmem>>, vector<1x8x384xbf16>
    %44 = vector.shape_cast %43 : vector<1x8x384xbf16> to vector<8x384xbf16>
    %cst_41 = arith.constant dense<0.000000e+00> : vector<8x384xf32>
    %45 = tpu.matmul %42, %44, %cst_41 {dimension_numbers = #tpu.dot_dimension_numbers<[1], [0], [0], [1], [0, 0, 1, 1], [], []>} : vector<8x8xbf16>, vector<8x384xbf16>, vector<8x384xf32> -> vector<8x384xf32>
    %46 = arith.addf %40, %45 : vector<8x384xf32>
    %c8 = arith.constant 8 : index
    %c0_42 = arith.constant 0 : index
    %c0_43 = arith.constant 0 : index
    %47 = vector.load %arg2[%c8, %c0_42, %c0_43] : memref<9x8x8xbf16, #tpu.memory_space<vmem>>, vector<1x8x8xbf16>
    %48 = vector.shape_cast %47 : vector<1x8x8xbf16> to vector<8x8xbf16>
    %c0_44 = arith.constant 0 : index
    %c0_45 = arith.constant 0 : index
    %c38 = arith.constant 38 : index
    %49 = vector.load %arg1[%c0_44, %c0_45, %c38] : memref<1x8x512xbf16, #tpu.memory_space<vmem>>, vector<1x8x384xbf16>
    %50 = vector.shape_cast %49 : vector<1x8x384xbf16> to vector<8x384xbf16>
    %cst_46 = arith.constant dense<0.000000e+00> : vector<8x384xf32>
    %51 = tpu.matmul %48, %50, %cst_46 {dimension_numbers = #tpu.dot_dimension_numbers<[1], [0], [0], [1], [0, 0, 1, 1], [], []>} : vector<8x8xbf16>, vector<8x384xbf16>, vector<8x384xf32> -> vector<8x384xf32>
    %52 = arith.addf %46, %51 : vector<8x384xf32>
    %c0_47 = arith.constant 0 : index
    %c0_48 = arith.constant 0 : index
    %53 = vector.load %arg3[%c0_47, %c0_48] : memref<8x1xf32, #tpu.memory_space<vmem>>, vector<8x1xf32>
    %54 = vector.broadcast %53 : vector<8x1xf32> to vector<8x384xf32>
    %55 = arith.mulf %52, %54 : vector<8x384xf32>
    %c0_49 = arith.constant 0 : index
    %c0_50 = arith.constant 0 : index
    %56 = vector.load %arg4[%c0_49, %c0_50] : memref<8x1xf32, #tpu.memory_space<vmem>>, vector<8x1xf32>
    %57 = vector.broadcast %56 : vector<8x1xf32> to vector<8x384xf32>
    %58 = arith.addf %55, %57 : vector<8x384xf32>
    %cst_51 = arith.constant 0.000000e+00 : f32
    %59 = vector.broadcast %cst_51 : f32 to vector<8x384xf32>
    %60 = arith.maximumf %58, %59 : vector<8x384xf32>
    %c0_52 = arith.constant 0 : index
    %c0_53 = arith.constant 0 : index
    %c0_54 = arith.constant 0 : index
    %61 = vector.load %arg5[%c0_52, %c0_53, %c0_54] : memref<1x8x384xf32, #tpu.memory_space<vmem>>, vector<1x8x384xf32>
    %62 = vector.shape_cast %61 : vector<1x8x384xf32> to vector<8x384xf32>
    %63 = vector.shape_cast %60 : vector<8x384xf32> to vector<1x8x384xf32>
    tpu.vector_store %arg5[%c0_52, %c0_53, %c0_54], %63 {strides = array<i32>} : memref<1x8x384xf32, #tpu.memory_space<vmem>>, vector<1x8x384xf32>,
    return
  }
  func.func @transform_0(%arg0: i32) -> (i32, i32, i32) {
    %c0_i32 = arith.constant 0 : i32
    %c0_i32_0 = arith.constant 0 : i32
    %c0_i32_1 = arith.constant 0 : i32
    return %arg0, %c0_i32, %c0_i32_0 : i32, i32, i32
  }
  func.func @transform_1(%arg0: i32) -> (i32, i32, i32) {
    %c0_i32 = arith.constant 0 : i32
    %c0_i32_0 = arith.constant 0 : i32
    %c0_i32_1 = arith.constant 0 : i32
    %c0_i32_2 = arith.constant 0 : i32
    return %c0_i32, %c0_i32_0, %c0_i32_1 : i32, i32, i32
  }
  func.func @transform_2(%arg0: i32) -> (i32, i32) {
    %c0_i32 = arith.constant 0 : i32
    %c0_i32_0 = arith.constant 0 : i32
    %c0_i32_1 = arith.constant 0 : i32
    return %c0_i32, %c0_i32_0 : i32, i32
  }
  func.func @transform_3(%arg0: i32) -> (i32, i32) {
    %c0_i32 = arith.constant 0 : i32
    %c0_i32_0 = arith.constant 0 : i32
    %c0_i32_1 = arith.constant 0 : i32
    return %c0_i32, %c0_i32_0 : i32, i32
  }
  func.func @transform_4(%arg0: i32) -> (i32, i32, i32) {
    %c0_i32 = arith.constant 0 : i32
    %c0_i32_0 = arith.constant 0 : i32
    %c0_i32_1 = arith.constant 0 : i32
    return %arg0, %c0_i32, %c0_i32_0 : i32, i32, i32
  }
}

</mosaic_0001>

<llo_original>
// kernel: conv_bn_relu_forward.2
$region0: #{conv_bn_relu_forward.2}
  #allocation0 [shape = 'u32[]', space=smem, size = 0x4, offset = 0x4, fixed_abs, tag = 'smem constant byte address 0x4 - core index']
  #allocation1 [shape = 'u32[144,128]{1,0:T(1,128)}', space=vmem, size = 0x12000, scoped, tag = 'internal scratch']
  %s0 = inlined_call_operand.vmem [shape: bf16[2,8,512], index: 0, kind: input, shape index: {}]
  %s1 = inlined_call_operand.vmem [shape: bf16[9,8,8], index: 1, kind: input, shape index: {}]
  %s2 = inlined_call_operand.vmem [shape: f32[1,384], index: 2, kind: input, shape index: {}]
  %s3 = inlined_call_operand.vmem [shape: f32[2,8,1], index: 3, kind: output, shape index: {0}]
  %s4 = inlined_call_operand.vmem [shape: f32[2,8,1], index: 4, kind: output, shape index: {1}]
  %5 = xla_tuple %s3, %s4
  %s6 = sld [smem:[#allocation0]]
  $region53: #{conv_bn_relu_forward.2} parent=0
    _
  %s8 = ssub.s32 1, %s6
  %s9 = scalar_select 0, %s8, %s6
  loop: start=0, step=1, limit=4
  $region2: #{conv_bn_relu_forward.2} parent=0 // loop_pre_header
    _
  $region3: #{conv_bn_relu_forward.2} parent=0 // loop_header
    %s11 = sphi 0, %s15
    %p12 = scmp.ge.s32.totalorder %s11, 4
    %s21 = sphi 0, %s23
    %s24 = sphi 0, %s21
    %s25 = sphi 0, %s24
    %s41 = sphi 0, %s25
    %s45 = sphi 0, %s45
    %s47 = sphi 0, %s45
    %s48 = sphi 0, %s47
    %s62 = sphi 0, %s48
    %s66 = sphi 0, %s66
    %s68 = sphi 0, %s66
    %s69 = sphi 0, %s68
    %s83 = sphi 0, %s69
    %s89 = sphi 0, %s91
    %s92 = sphi 0, %s89
    %s93 = sphi 0, %s92
    %s109 = sphi 0, %s93
    %s115 = sphi 0, %s117
    %s118 = sphi 0, %s115
    %s119 = sphi 0, %s118
    %s135 = sphi 0, %s119
  $region4: #{conv_bn_relu_forward.2} parent=0 // loop_header_branch
    %14 = sbr.rel (%p12) target = $region8
  $region5: #{conv_bn_relu_forward.2} parent=0 // loop_body
    %s16 = ssub.s32 %s11, 1
    %s17 = ssub.s32 %s11, 2
    %s18 = sadd.s32 %s11, 1
    %s19 = ssub.s32 %s11, %s18
    %p20 = scmp.eq.s32.totalorder %s19, 0
    %s22 = sadd.s32 %s21, 1
    %s23 = scalar_select %p20, %s21, %s22
    %p26 = pneg %p20
    %p27 = scmp.eq.s32.totalorder %s11, 1
    %p28 = por %p26, %p27
    %p29 = scmp.ne.s32.totalorder %s21, %s24
    %p30 = scmp.eq.s32.totalorder %s11, 0
    %p31 = por %p29, %p30
    %p32 = scmp.ne.s32.totalorder %s21, %s24
    %p33 = scmp.eq.s32.totalorder %s16, 1
    %p34 = por %p32, %p33
    %p35 = scmp.ne.s32.totalorder %s24, %s25
    %p36 = scmp.eq.s32.totalorder %s16, 0
    %p37 = por %p35, %p36
    %p38 = scmp.ne.s32.totalorder %s24, %s25
    %p39 = scmp.eq.s32.totalorder %s17, 1
    %p40 = por %p38, %p39
    %p42 = scmp.ne.s32.totalorder %s25, %s41
    %p43 = scmp.eq.s32.totalorder %s17, 0
    %p44 = por %p42, %p43
    %s46 = sadd.s32 %s45, 1
    %p49 = scmp.eq.s32.totalorder %s11, 1
    %p50 = scmp.ne.s32.totalorder %s45, %s47
    %p51 = scmp.eq.s32.totalorder %s11, 0
    %p52 = por %p50, %p51
    %p53 = scmp.ne.s32.totalorder %s45, %s47
    %p54 = scmp.eq.s32.totalorder %s16, 1
    %p55 = por %p53, %p54
    %p56 = scmp.ne.s32.totalorder %s47, %s48
    %p57 = scmp.eq.s32.totalorder %s16, 0
    %p58 = por %p56, %p57
    %p59 = scmp.ne.s32.totalorder %s47, %s48
    %p60 = scmp.eq.s32.totalorder %s17, 1
    %p61 = por %p59, %p60
    %p63 = scmp.ne.s32.totalorder %s48, %s62
    %p64 = scmp.eq.s32.totalorder %s17, 0
    %p65 = por %p63, %p64
    %s67 = sadd.s32 %s66, 1
    %p70 = scmp.eq.s32.totalorder %s11, 1
    %p71 = scmp.ne.s32.totalorder %s66, %s68
    %p72 = scmp.eq.s32.totalorder %s11, 0
    %p73 = por %p71, %p72
    %p74 = scmp.ne.s32.totalorder %s66, %s68
    %p75 = scmp.eq.s32.totalorder %s16, 1
    %p76 = por %p74, %p75
    %p77 = scmp.ne.s32.totalorder %s68, %s69
    %p78 = scmp.eq.s32.totalorder %s16, 0
    %p79 = por %p77, %p78
    %p80 = scmp.ne.s32.totalorder %s68, %s69
    %p81 = scmp.eq.s32.totalorder %s17, 1
    %p82 = por %p80, %p81
    %p84 = scmp.ne.s32.totalorder %s69, %s83
    %p85 = scmp.eq.s32.totalorder %s17, 0
    %p86 = por %p84, %p85
    %s87 = ssub.s32 %s11, %s18
    %p88 = scmp.eq.s32.totalorder %s87, 0
    %s90 = sadd.s32 %s89, 1
    %s91 = scalar_select %p88, %s89, %s90
    %p94 = pneg %p88
    %p95 = scmp.eq.s32.totalorder %s11, 1
    %p96 = por %p94, %p95
    %p97 = scmp.ne.s32.totalorder %s89, %s92
    %p98 = scmp.eq.s32.totalorder %s11, 0
    %p99 = por %p97, %p98
    %p100 = scmp.ne.s32.totalorder %s89, %s92
    %p101 = scmp.eq.s32.totalorder %s16, 1
    %p102 = por %p100, %p101
    %p103 = scmp.ne.s32.totalorder %s92, %s93
    %p104 = scmp.eq.s32.totalorder %s16, 0
    %p105 = por %p103, %p104
    %p106 = scmp.ne.s32.totalorder %s92, %s93
    %p107 = scmp.eq.s32.totalorder %s17, 1
    %p108 = por %p106, %p107
    %p110 = scmp.ne.s32.totalorder %s93, %s109
    %p111 = scmp.eq.s32.totalorder %s17, 0
    %p112 = por %p110, %p111
    %s113 = ssub.s32 %s11, %s18
    %p114 = scmp.eq.s32.totalorder %s113, 0
    %s116 = sadd.s32 %s115, 1
    %s117 = scalar_select %p114, %s115, %s116
    %p120 = pneg %p114
    %p121 = scmp.eq.s32.totalorder %s11, 1
    %p122 = por %p120, %p121
    %p123 = scmp.ne.s32.totalorder %s115, %s118
    %p124 = scmp.eq.s32.totalorder %s11, 0
    %p125 = por %p123, %p124
    %p126 = scmp.ne.s32.totalorder %s115, %s118
    %p127 = scmp.eq.s32.totalorder %s16, 1
    %p128 = por %p126, %p127
    %p129 = scmp.ne.s32.totalorder %s118, %s119
    %p130 = scmp.eq.s32.totalorder %s16, 0
    %p131 = por %p129, %p130
    %p132 = scmp.ne.s32.totalorder %s118, %s119
    %p133 = scmp.eq.s32.totalorder %s17, 1
    %p134 = por %p132, %p133
    %p136 = scmp.ne.s32.totalorder %s119, %s135
    %p137 = scmp.eq.s32.totalorder %s17, 0
    %p138 = por %p136, %p137
    %p139 = scmp.le.s32.totalorder 1, %s11
    %p140 = scmp.lt.s32.totalorder %s11, 3
    %p141 = pnand %p139, %p140
    %p142 = pneg %p141
    // Predicated region
    $region9: #{conv_bn_relu_forward.2} parent=5 // pred_check
      _
    $region10: #{conv_bn_relu_forward.2} parent=5 // pred_check_branch
      %144 = sbr.rel (%p141) target = $region12
    $region11: #{conv_bn_relu_forward.2} parent=5 // pred_region
      %s145 = ssub.s32 %s11, 1
      // Predicated region
      $region13: #{conv_bn_relu_forward.2} parent=11 // pred_check
        %p146 = pneg %p58
      $region14: #{conv_bn_relu_forward.2} parent=11 // pred_check_branch
        %148 = sbr.rel (%p146) target = $region16
      $region15: #{conv_bn_relu_forward.2} parent=11 // pred_region
        _
      $region16: #{conv_bn_relu_forward.2} parent=11 // pred_fallthru
        _
      // Predicated region
      $region17: #{conv_bn_relu_forward.2} parent=11 // pred_check
        %p149 = pneg %p79
      $region18: #{conv_bn_relu_forward.2} parent=11 // pred_check_branch
        %151 = sbr.rel (%p149) target = $region20
      $region19: #{conv_bn_relu_forward.2} parent=11 // pred_region
        _
      $region20: #{conv_bn_relu_forward.2} parent=11 // pred_fallthru
        _
    $region12: #{conv_bn_relu_forward.2} parent=5 // pred_fallthru
      _
    %p152 = scmp.lt.s32.totalorder %s11, 2
    // Predicated region
    $region21: #{conv_bn_relu_forward.2} parent=5 // pred_check
      %p153 = pneg %p152
    $region22: #{conv_bn_relu_forward.2} parent=5 // pred_check_branch
      %155 = sbr.rel (%p153) target = $region24
    $region23: #{conv_bn_relu_forward.2} parent=5 // pred_region
      // Predicated region
      $region25: #{conv_bn_relu_forward.2} parent=23 // pred_check
        %p156 = pneg %p31
      $region26: #{conv_bn_relu_forward.2} parent=23 // pred_check_branch
        %158 = sbr.rel (%p156) target = $region28
      $region27: #{conv_bn_relu_forward.2} parent=23 // pred_region
        %p159 = scmp.lt.s32.totalorder %s11, 1
        %s160 = scalar_select %p159, %s11, 1
        %s161 = smul.addr %s160, 4
        %s162 = smul.addr %s161, 4
        %s163 = scalar_lea.vmem %s0, %s162
      $region28: #{conv_bn_relu_forward.2} parent=23 // pred_fallthru
        _
    $region24: #{conv_bn_relu_forward.2} parent=5 // pred_fallthru
      _
    %p164 = scmp.le.s32.totalorder 1, %s11
    %p165 = scmp.lt.s32.totalorder %s11, 3
    %p166 = pnand %p164, %p165
    %p167 = pneg %p166
    // Predicated region
    $region29: #{conv_bn_relu_forward.2} parent=5 // pred_check
      _
    $region30: #{conv_bn_relu_forward.2} parent=5 // pred_check_branch
      %169 = sbr.rel (%p166) target = $region32
    $region31: #{conv_bn_relu_forward.2} parent=5 // pred_region
      %s170 = ssub.s32 %s11, 1
      %p171 = scmp.lt.s32.totalorder %s16, 1
      %s172 = scalar_select %p171, %s16, 1
      %s173 = smul.addr %s172, 4
      %s174 = smul.addr %s173, 4
      %s175 = scalar_lea.vmem %s0, %s174
      %p176 = pneg %p37
      %p177 = pneg %p34
      %p178 = pneg %p58
      %p179 = pneg %p55
      %p180 = pneg %p79
      %p181 = pneg %p76
      %p182 = pneg %p105
      %p183 = pneg %p102
      %p184 = scmp.lt.s32.totalorder %s16, 1
      %s185 = scalar_select %p184, %s16, 1
      %s186 = smul.addr %s185, 8
      %s187 = scalar_lea.vmem %s3, %s186
      %p188 = pneg %p131
      %p189 = pneg %p128
      %p190 = scmp.lt.s32.totalorder %s16, 1
      %s191 = scalar_select %p190, %s16, 1
      %s192 = smul.addr %s191, 8
      %s193 = scalar_lea.vmem %s4, %s192
      %p194 = scmp.lt.s32.totalorder %s16, 1
      %s195 = scalar_select %p194, %s16, 1
      %s196 = smul.addr %s195, 4
      %s197 = smul.addr %s196, 4
      %s198 = scalar_lea.vmem %s0, %s197
      %p199 = scmp.lt.s32.totalorder %s16, 1
      %s200 = scalar_select %p199, %s16, 1
      %s201 = smul.addr %s200, 8
      %s202 = scalar_lea.vmem %s3, %s201
      %p203 = scmp.lt.s32.totalorder %s16, 1
      %s204 = scalar_select %p203, %s16, 1
      %s205 = smul.addr %s204, 8
      %s206 = scalar_lea.vmem %s4, %s205
      %v208 = vld [vmem:[%s1] sm:$0xf]
      %v209 = vld [vmem:[%s198] sm:$0xff]
      %v210 = vld [vmem:[%s198 + $0x8] sm:$0xf]
      %s211 = scalar_lea.vmem %s1, 4
      %v212 = vld [vmem:[%s211] sm:$0xf]
      %v213 = vld [vmem:[%s198] sm:$0xff]
      %v214 = vld [vmem:[%s198 + $0x8] sm:$0xff]
      %v217 = vunpack.c.l.b16 %v213
      %v218 = vunpack.c.h.b16 %v213
      %v219 = vunpack.c.l.b16 %v214
      %v220 = vunpack.c.h.b16 %v214
      %v221 = vpack.c.b16 %v217, %v217
      %v222 = vpack.c.b16 %v218, %v218
      %v223 = vpack.c.b16 %v219, %v219
      %v224 = vpack.c.b16 %v220, %v220
      %225 = vrot.lane.b32.xlu0 %v221, 127
      %v226 = vpop.permute.xlu0 %225
      %227 = vrot.lane.b32.xlu0 %v222, 127
      %v228 = vpop.permute.xlu0 %227
      %229 = vrot.lane.b32.xlu0 %v223, 127
      %v230 = vpop.permute.xlu0 %229
      %231 = vrot.lane.b32.xlu0 %v224, 127
      %v232 = vpop.permute.xlu0 %231
      %vm233 = vcmask 1039360
      %v234 = vsel %vm233, %v226, %v228
      %v235 = vsel %vm233, %v228, %v230
      %v236 = vsel %vm233, %v230, %v232
      %vm237 = vcmask 64512
      %v239 = vsel %vm237, %v212, 0
      %vm241 = vcmask 1043456
      %v243 = vsel %vm241, %v234, 0
      %v246 = vsel %vm241, %v235, 0
      %v249 = vsel %vm241, %v236, 0
      %251 = vmatprep.subr.bf16.mxu0 0
      %252 = vmatpush1.bf16.msra.mxu0 0
      %253 = vmatprep.subr.bf16.mxu0 0
      %254 = vmatpush1.bf16.msra.mxu0 0
      %255 = vmatprep.subr.bf16.mxu0 0
      %256 = vmatpush1.bf16.msra.mxu0 0
      %257 = vmatprep.subr.bf16.mxu0 0
      %258 = vmatpush1.bf16.msra.mxu0 0
      %259 = vmatprep.subr.bf16.mxu0 0
      %260 = vmatpush1.bf16.msra.mxu0 0
      %261 = vmatprep.subr.bf16.mxu0 0
      %262 = vmatpush1.bf16.msra.mxu0 0
      %263 = vmatprep.subr.bf16.mxu0 0
      %264 = vmatpush1.bf16.msra.mxu0 0
      %265 = vmatprep.subr.bf16.mxu0 %v246
      %266 = vmatpush1.bf16.msra.mxu0 %v243
      %267 = vmatprep.subr.bf16.mxu0 0
      %268 = vmatpush2.bf16.msra.mxu0 0
      %269 = vmatprep.subr.bf16.mxu0 0
      %270 = vmatpush2.bf16.msra.mxu0 0
      %271 = vmatprep.subr.bf16.mxu0 0
      %272 = vmatpush2.bf16.msra.mxu0 0
      %273 = vmatprep.subr.bf16.mxu0 0
      %274 = vmatpush2.bf16.msra.mxu0 0
      %275 = vmatprep.subr.bf16.mxu0 0
      %276 = vmatpush2.bf16.msra.mxu0 0
      %277 = vmatprep.subr.bf16.mxu0 0
      %278 = vmatpush2.bf16.msra.mxu0 0
      %279 = vmatprep.subr.bf16.mxu0 0
      %280 = vmatpush2.bf16.msra.mxu0 0
      %281 = vmatprep.subr.bf16.mxu0 0
      %282 = vmatpush2.bf16.msra.mxu0 0
      %283 = vmatprep.mubr.bf16.mxu0 0
      %284 = vmatmul.mubr.bf16.gmra.mxu0 %v239
      %v285 = vpop.f32.mrf.mxu0
      %v286 = vadd.f32 0.0, %v285
      %v287 = vpop.f32.mrf.mxu0
      %v288 = vadd.f32 0.0, %v287
      %v289 = vpop.f32.mrf.mxu0
      %v290 = vpop.f32.mrf.mxu0
      %291 = vdwg.mxu0
      %292 = vmatprep.subr.bf16.mxu0 0
      %293 = vmatpush1.bf16.msra.mxu0 0
      %294 = vmatprep.subr.bf16.mxu0 0
      %295 = vmatpush1.bf16.msra.mxu0 0
      %296 = vmatprep.subr.bf16.mxu0 0
      %297 = vmatpush1.bf16.msra.mxu0 0
      %298 = vmatprep.subr.bf16.mxu0 0
      %299 = vmatpush1.bf16.msra.mxu0 0
      %300 = vmatprep.subr.bf16.mxu0 0
      %301 = vmatpush1.bf16.msra.mxu0 0
      %302 = vmatprep.subr.bf16.mxu0 0
      %303 = vmatpush1.bf16.msra.mxu0 0
      %304 = vmatprep.subr.bf16.mxu0 0
      %305 = vmatpush1.bf16.msra.mxu0 0
      %306 = vmatprep.subr.bf16.mxu0 0
      %307 = vmatpush1.bf16.msra.mxu0 %v249
      %308 = vmatprep.subr.bf16.mxu0 0
      %309 = vmatpush2.bf16.msra.mxu0 0
      %310 = vmatprep.subr.bf16.mxu0 0
      %311 = vmatpush2.bf16.msra.mxu0 0
      %312 = vmatprep.subr.bf16.mxu0 0
      %313 = vmatpush2.bf16.msra.mxu0 0
      %314 = vmatprep.subr.bf16.mxu0 0
      %315 = vmatpush2.bf16.msra.mxu0 0
      %316 = vmatprep.subr.bf16.mxu0 0
      %317 = vmatpush2.bf16.msra.mxu0 0
      %318 = vmatprep.subr.bf16.mxu0 0
      %319 = vmatpush2.bf16.msra.mxu0 0
      %320 = vmatprep.subr.bf16.mxu0 0
      %321 = vmatpush2.bf16.msra.mxu0 0
      %322 = vmatprep.subr.bf16.mxu0 0
      %323 = vmatpush2.bf16.msra.mxu0 0
      %324 = vmatprep.mubr.bf16.mxu0 0
      %325 = vmatmul.mubr.bf16.gmra.mxu0 %v239
      %v326 = vpop.f32.mrf.mxu0
      %v327 = vadd.f32 0.0, %v326
      %v328 = vpop.f32.mrf.mxu0
      %v329 = vpop.f32.mrf.mxu0
      %v330 = vpop.f32.mrf.mxu0
      %331 = vdwg.mxu0
      %v334 = vunpack.c.l.b16 %v209
      %v335 = vunpack.c.h.b16 %v209
      %v336 = vunpack.c.l.b16 %v210
      %v337 = vpack.c.b16 %v334, %v334
      %v338 = vpack.c.b16 %v335, %v335
      %v339 = vpack.c.b16 %v336, %v336
      %v341 = vsel %vm237, %v208, 0
      %v344 = vsel %vm241, %v337, 0
      %v347 = vsel %vm241, %v338, 0
      %v350 = vsel %vm241, %v339, 0
      %352 = vmatprep.subr.bf16.mxu0 0
      %353 = vmatpush1.bf16.msra.mxu0 0
      %354 = vmatprep.subr.bf16.mxu0 0
      %355 = vmatpush1.bf16.msra.mxu0 0
      %356 = vmatprep.subr.bf16.mxu0 0
      %357 = vmatpush1.bf16.msra.mxu0 0
      %358 = vmatprep.subr.bf16.mxu0 0
      %359 = vmatpush1.bf16.msra.mxu0 0
      %360 = vmatprep.subr.bf16.mxu0 0
      %361 = vmatpush1.bf16.msra.mxu0 0
      %362 = vmatprep.subr.bf16.mxu0 0
      %363 = vmatpush1.bf16.msra.mxu0 0
      %364 = vmatprep.subr.bf16.mxu0 0
      %365 = vmatpush1.bf16.msra.mxu0 0
      %366 = vmatprep.subr.bf16.mxu0 %v347
      %367 = vmatpush1.bf16.msra.mxu0 %v344
      %368 = vmatprep.subr.bf16.mxu0 0
      %369 = vmatpush2.bf16.msra.mxu0 0
      %370 = vmatprep.subr.bf16.mxu0 0
      %371 = vmatpush2.bf16.msra.mxu0 0
      %372 = vmatprep.subr.bf16.mxu0 0
      %373 = vmatpush2.bf16.msra.mxu0 0
      %374 = vmatprep.subr.bf16.mxu0 0
      %375 = vmatpush2.bf16.msra.mxu0 0
      %376 = vmatprep.subr.bf16.mxu0 0
      %377 = vmatpush2.bf16.msra.mxu0 0
      %378 = vmatprep.subr.bf16.mxu0 0
      %379 = vmatpush2.bf16.msra.mxu0 0
      %380 = vmatprep.subr.bf16.mxu0 0
      %381 = vmatpush2.bf16.msra.mxu0 0
      %382 = vmatprep.subr.bf16.mxu0 0
      %383 = vmatpush2.bf16.msra.mxu0 0
      %384 = vmatprep.mubr.bf16.mxu0 0
      %385 = vmatmul.mubr.bf16.gmra.mxu0 %v341
      %v386 = vpop.f32.mrf.mxu0
      %v387 = vadd.f32 %v286, %v386
      %v388 = vpop.f32.mrf.mxu0
      %v389 = vadd.f32 %v288, %v388
      %v390 = vpop.f32.mrf.mxu0
      %v391 = vpop.f32.mrf.mxu0
      %392 = vdwg.mxu0
      %393 = vmatprep.subr.bf16.mxu0 0
      %394 = vmatpush1.bf16.msra.mxu0 0
      %395 = vmatprep.subr.bf16.mxu0 0
      %396 = vmatpush1.bf16.msra.mxu0 0
      %397 = vmatprep.subr.bf16.mxu0 0
      %398 = vmatpush1.bf16.msra.mxu0 0
      %399 = vmatprep.subr.bf16.mxu0 0
      %400 = vmatpush1.bf16.msra.mxu0 0
      %401 = vmatprep.subr.bf16.mxu0 0
      %402 = vmatpush1.bf16.msra.mxu0 0
      %403 = vmatprep.subr.bf16.mxu0 0
      %404 = vmatpush1.bf16.msra.mxu0 0
      %405 = vmatprep.subr.bf16.mxu0 0
      %406 = vmatpush1.bf16.msra.mxu0 0
      %407 = vmatprep.subr.bf16.mxu0 0
      %408 = vmatpush1.bf16.msra.mxu0 %v350
      %409 = vmatprep.subr.bf16.mxu0 0
      %410 = vmatpush2.bf16.msra.mxu0 0
      %411 = vmatprep.subr.bf16.mxu0 0
      %412 = vmatpush2.bf16.msra.mxu0 0
      %413 = vmatprep.subr.bf16.mxu0 0
      %414 = vmatpush2.bf16.msra.mxu0 0
      %415 = vmatprep.subr.bf16.mxu0 0
      %416 = vmatpush2.bf16.msra.mxu0 0
      %417 = vmatprep.subr.bf16.mxu0 0
      %418 = vmatpush2.bf16.msra.mxu0 0
      %419 = vmatprep.subr.bf16.mxu0 0
      %420 = vmatpush2.bf16.msra.mxu0 0
      %421 = vmatprep.subr.bf16.mxu0 0
      %422 = vmatpush2.bf16.msra.mxu0 0
      %423 = vmatprep.subr.bf16.mxu0 0
      %424 = vmatpush2.bf16.msra.mxu0 0
      %425 = vmatprep.mubr.bf16.mxu0 0
      %426 = vmatmul.mubr.bf16.gmra.mxu0 %v341
      %v427 = vpop.f32.mrf.mxu0
      %v428 = vadd.f32 %v327, %v427
      %v429 = vpop.f32.mrf.mxu0
      %v430 = vpop.f32.mrf.mxu0
      %v431 = vpop.f32.mrf.mxu0
      %432 = vdwg.mxu0
      %s433 = scalar_lea.vmem %s1, 8
      %v434 = vld [vmem:[%s433] sm:$0xf]
      %435 = vrot.lane.b32.xlu0 %v221, 126
      %v436 = vpop.permute.xlu0 %435
      %437 = vrot.lane.b32.xlu0 %v222, 126
      %v438 = vpop.permute.xlu0 %437
      %439 = vrot.lane.b32.xlu0 %v223, 126
      %v440 = vpop.permute.xlu0 %439
      %441 = vrot.lane.b32.xlu0 %v224, 126
      %v442 = vpop.permute.xlu0 %441
      %vm443 = vcmask 1031168
      %v444 = vsel %vm443, %v436, %v438
      %v445 = vsel %vm443, %v438, %v440
      %v446 = vsel %vm443, %v440, %v442
      %v448 = vsel %vm237, %v434, 0
      %v451 = vsel %vm241, %v444, 0
      %v454 = vsel %vm241, %v445, 0
      %v457 = vsel %vm241, %v446, 0
      %459 = vmatprep.subr.bf16.mxu0 0
      %460 = vmatpush1.bf16.msra.mxu0 0
      %461 = vmatprep.subr.bf16.mxu0 0
      %462 = vmatpush1.bf16.msra.mxu0 0
      %463 = vmatprep.subr.bf16.mxu0 0
      %464 = vmatpush1.bf16.msra.mxu0 0
      %465 = vmatprep.subr.bf16.mxu0 0
      %466 = vmatpush1.bf16.msra.mxu0 0
      %467 = vmatprep.subr.bf16.mxu0 0
      %468 = vmatpush1.bf16.msra.mxu0 0
      %469 = vmatprep.subr.bf16.mxu0 0
      %470 = vmatpush1.bf16.msra.mxu0 0
      %471 = vmatprep.subr.bf16.mxu0 0
      %472 = vmatpush1.bf16.msra.mxu0 0
      %473 = vmatprep.subr.bf16.mxu0 %v454
      %474 = vmatpush1.bf16.msra.mxu0 %v451
      %475 = vmatprep.subr.bf16.mxu0 0
      %476 = vmatpush2.bf16.msra.mxu0 0
      %477 = vmatprep.subr.bf16.mxu0 0
      %478 = vmatpush2.bf16.msra.mxu0 0
      %479 = vmatprep.subr.bf16.mxu0 0
      %480 = vmatpush2.bf16.msra.mxu0 0
      %481 = vmatprep.subr.bf16.mxu0 0
      %482 = vmatpush2.bf16.msra.mxu0 0
      %483 = vmatprep.subr.bf16.mxu0 0
      %484 = vmatpush2.bf16.msra.mxu0 0
      %485 = vmatprep.subr.bf16.mxu0 0
      %486 = vmatpush2.bf16.msra.mxu0 0
      %487 = vmatprep.subr.bf16.mxu0 0
      %488 = vmatpush2.bf16.msra.mxu0 0
      %489 = vmatprep.subr.bf16.mxu0 0
      %490 = vmatpush2.bf16.msra.mxu0 0
      %491 = vmatprep.mubr.bf16.mxu0 0
      %492 = vmatmul.mubr.bf16.gmra.mxu0 %v448
      %v493 = vpop.f32.mrf.mxu0
      %v494 = vadd.f32 0.0, %v493
      %v495 = vpop.f32.mrf.mxu0
      %v496 = vadd.f32 0.0, %v495
      %v497 = vpop.f32.mrf.mxu0
      %v498 = vpop.f32.mrf.mxu0
      %499 = vdwg.mxu0
      %500 = vmatprep.subr.bf16.mxu0 0
      %501 = vmatpush1.bf16.msra.mxu0 0
      %502 = vmatprep.subr.bf16.mxu0 0
      %503 = vmatpush1.bf16.msra.mxu0 0
      %504 = vmatprep.subr.bf16.mxu0 0
      %505 = vmatpush1.bf16.msra.mxu0 0
      %506 = vmatprep.subr.bf16.mxu0 0
      %507 = vmatpush1.bf16.msra.mxu0 0
      %508 = vmatprep.subr.bf16.mxu0 0
      %509 = vmatpush1.bf16.msra.mxu0 0
      %510 = vmatprep.subr.bf16.mxu0 0
      %511 = vmatpush1.bf16.msra.mxu0 0
      %512 = vmatprep.subr.bf16.mxu0 0
      %513 = vmatpush1.bf16.msra.mxu0 0
      %514 = vmatprep.subr.bf16.mxu0 0
      %515 = vmatpush1.bf16.msra.mxu0 %v457
      %516 = vmatprep.subr.bf16.mxu0 0
      %517 = vmatpush2.bf16.msra.mxu0 0
      %518 = vmatprep.subr.bf16.mxu0 0
      %519 = vmatpush2.bf16.msra.mxu0 0
      %520 = vmatprep.subr.bf16.mxu0 0
      %521 = vmatpush2.bf16.msra.mxu0 0
      %522 = vmatprep.subr.bf16.mxu0 0
      %523 = vmatpush2.bf16.msra.mxu0 0
      %524 = vmatprep.subr.bf16.mxu0 0
      %525 = vmatpush2.bf16.msra.mxu0 0
      %526 = vmatprep.subr.bf16.mxu0 0
      %527 = vmatpush2.bf16.msra.mxu0 0
      %528 = vmatprep.subr.bf16.mxu0 0
      %529 = vmatpush2.bf16.msra.mxu0 0
      %530 = vmatprep.subr.bf16.mxu0 0
      %531 = vmatpush2.bf16.msra.mxu0 0
      %532 = vmatprep.mubr.bf16.mxu0 0
      %533 = vmatmul.mubr.bf16.gmra.mxu0 %v448
      %v534 = vpop.f32.mrf.mxu0
      %v535 = vadd.f32 0.0, %v534
      %v536 = vpop.f32.mrf.mxu0
      %v537 = vpop.f32.mrf.mxu0
      %v538 = vpop.f32.mrf.mxu0
      %539 = vdwg.mxu0
      %v540 = vadd.f32 %v387, %v494
      %v541 = vadd.f32 %v389, %v496
      %v542 = vadd.f32 %v428, %v535
      %s543 = scalar_lea.vmem %s1, 12
      %v544 = vld [vmem:[%s543] sm:$0xf]
      %545 = vrot.lane.b32.xlu0 %v221, 110
      %v546 = vpop.permute.xlu0 %545
      %547 = vrot.lane.b32.xlu0 %v222, 110
      %v548 = vpop.permute.xlu0 %547
      %549 = vrot.lane.b32.xlu0 %v223, 110
      %v550 = vpop.permute.xlu0 %549
      %551 = vrot.lane.b32.xlu0 %v224, 110
      %v552 = vpop.permute.xlu0 %551
      %vm553 = vcmask 900096
      %v554 = vsel %vm553, %v546, %v548
      %v555 = vsel %vm553, %v548, %v550
      %v556 = vsel %vm553, %v550, %v552
      %v558 = vsel %vm237, %v544, 0
      %v561 = vsel %vm241, %v554, 0
      %v564 = vsel %vm241, %v555, 0
      %v567 = vsel %vm241, %v556, 0
      %569 = vmatprep.subr.bf16.mxu0 0
      %570 = vmatpush1.bf16.msra.mxu0 0
      %571 = vmatprep.subr.bf16.mxu0 0
      %572 = vmatpush1.bf16.msra.mxu0 0
      %573 = vmatprep.subr.bf16.mxu0 0
      %574 = vmatpush1.bf16.msra.mxu0 0
      %575 = vmatprep.subr.bf16.mxu0 0
      %576 = vmatpush1.bf16.msra.mxu0 0
      %577 = vmatprep.subr.bf16.mxu0 0
      %578 = vmatpush1.bf16.msra.mxu0 0
      %579 = vmatprep.subr.bf16.mxu0 0
      %580 = vmatpush1.bf16.msra.mxu0 0
      %581 = vmatprep.subr.bf16.mxu0 0
      %582 = vmatpush1.bf16.msra.mxu0 0
      %583 = vmatprep.subr.bf16.mxu0 %v564
      %584 = vmatpush1.bf16.msra.mxu0 %v561
      %585 = vmatprep.subr.bf16.mxu0 0
      %586 = vmatpush2.bf16.msra.mxu0 0
      %587 = vmatprep.subr.bf16.mxu0 0
      %588 = vmatpush2.bf16.msra.mxu0 0
      %589 = vmatprep.subr.bf16.mxu0 0
      %590 = vmatpush2.bf16.msra.mxu0 0
      %591 = vmatprep.subr.bf16.mxu0 0
      %592 = vmatpush2.bf16.msra.mxu0 0
      %593 = vmatprep.subr.bf16.mxu0 0
      %594 = vmatpush2.bf16.msra.mxu0 0
      %595 = vmatprep.subr.bf16.mxu0 0
      %596 = vmatpush2.bf16.msra.mxu0 0
      %597 = vmatprep.subr.bf16.mxu0 0
      %598 = vmatpush2.bf16.msra.mxu0 0
      %599 = vmatprep.subr.bf16.mxu0 0
      %600 = vmatpush2.bf16.msra.mxu0 0
      %601 = vmatprep.mubr.bf16.mxu0 0
      %602 = vmatmul.mubr.bf16.gmra.mxu0 %v558
      %v603 = vpop.f32.mrf.mxu0
      %v604 = vadd.f32 0.0, %v603
      %v605 = vpop.f32.mrf.mxu0
      %v606 = vadd.f32 0.0, %v605
      %v607 = vpop.f32.mrf.mxu0
      %v608 = vpop.f32.mrf.mxu0
      %609 = vdwg.mxu0
      %610 = vmatprep.subr.bf16.mxu0 0
      %611 = vmatpush1.bf16.msra.mxu0 0
      %612 = vmatprep.subr.bf16.mxu0 0
      %613 = vmatpush1.bf16.msra.mxu0 0
      %614 = vmatprep.subr.bf16.mxu0 0
      %615 = vmatpush1.bf16.msra.mxu0 0
      %616 = vmatprep.subr.bf16.mxu0 0
      %617 = vmatpush1.bf16.msra.mxu0 0
      %618 = vmatprep.subr.bf16.mxu0 0
      %619 = vmatpush1.bf16.msra.mxu0 0
      %620 = vmatprep.subr.bf16.mxu0 0
      %621 = vmatpush1.bf16.msra.mxu0 0
      %622 = vmatprep.subr.bf16.mxu0 0
      %623 = vmatpush1.bf16.msra.mxu0 0
      %624 = vmatprep.subr.bf16.mxu0 0
      %625 = vmatpush1.bf16.msra.mxu0 %v567
      %626 = vmatprep.subr.bf16.mxu0 0
      %627 = vmatpush2.bf16.msra.mxu0 0
      %628 = vmatprep.subr.bf16.mxu0 0
      %629 = vmatpush2.bf16.msra.mxu0 0
      %630 = vmatprep.subr.bf16.mxu0 0
      %631 = vmatpush2.bf16.msra.mxu0 0
      %632 = vmatprep.subr.bf16.mxu0 0
      %633 = vmatpush2.bf16.msra.mxu0 0
      %634 = vmatprep.subr.bf16.mxu0 0
      %635 = vmatpush2.bf16.msra.mxu0 0
      %636 = vmatprep.subr.bf16.mxu0 0
      %637 = vmatpush2.bf16.msra.mxu0 0
      %638 = vmatprep.subr.bf16.mxu0 0
      %639 = vmatpush2.bf16.msra.mxu0 0
      %640 = vmatprep.subr.bf16.mxu0 0
      %641 = vmatpush2.bf16.msra.mxu0 0
      %642 = vmatprep.mubr.bf16.mxu0 0
      %643 = vmatmul.mubr.bf16.gmra.mxu0 %v558
      %v644 = vpop.f32.mrf.mxu0
      %v645 = vadd.f32 0.0, %v644
      %v646 = vpop.f32.mrf.mxu0
      %v647 = vpop.f32.mrf.mxu0
      %v648 = vpop.f32.mrf.mxu0
      %649 = vdwg.mxu0
      %v650 = vadd.f32 %v540, %v604
      %v651 = vadd.f32 %v541, %v606
      %v652 = vadd.f32 %v542, %v645
      %s653 = scalar_lea.vmem %s1, 16
      %v654 = vld [vmem:[%s653] sm:$0xf]
      %655 = vrot.lane.b32.xlu0 %v221, 109
      %v656 = vpop.permute.xlu0 %655
      %657 = vrot.lane.b32.xlu0 %v222, 109
      %v658 = vpop.permute.xlu0 %657
      %659 = vrot.lane.b32.xlu0 %v223, 109
      %v660 = vpop.permute.xlu0 %659
      %661 = vrot.lane.b32.xlu0 %v224, 109
      %v662 = vpop.permute.xlu0 %661
      %vm663 = vcmask 891904
      %v664 = vsel %vm663, %v656, %v658
      %v665 = vsel %vm663, %v658, %v660
      %v666 = vsel %vm663, %v660, %v662
      %v668 = vsel %vm237, %v654, 0
      %v671 = vsel %vm241, %v664, 0
      %v674 = vsel %vm241, %v665, 0
      %v677 = vsel %vm241, %v666, 0
      %679 = vmatprep.subr.bf16.mxu0 0
      %680 = vmatpush1.bf16.msra.mxu0 0
      %681 = vmatprep.subr.bf16.mxu0 0
      %682 = vmatpush1.bf16.msra.mxu0 0
      %683 = vmatprep.subr.bf16.mxu0 0
      %684 = vmatpush1.bf16.msra.mxu0 0
      %685 = vmatprep.subr.bf16.mxu0 0
      %686 = vmatpush1.bf16.msra.mxu0 0
      %687 = vmatprep.subr.bf16.mxu0 0
      %688 = vmatpush1.bf16.msra.mxu0 0
      %689 = vmatprep.subr.bf16.mxu0 0
      %690 = vmatpush1.bf16.msra.mxu0 0
      %691 = vmatprep.subr.bf16.mxu0 0
      %692 = vmatpush1.bf16.msra.mxu0 0
      %693 = vmatprep.subr.bf16.mxu0 %v674
      %694 = vmatpush1.bf16.msra.mxu0 %v671
      %695 = vmatprep.subr.bf16.mxu0 0
      %696 = vmatpush2.bf16.msra.mxu0 0
      %697 = vmatprep.subr.bf16.mxu0 0
      %698 = vmatpush2.bf16.msra.mxu0 0
      %699 = vmatprep.subr.bf16.mxu0 0
      %700 = vmatpush2.bf16.msra.mxu0 0
      %701 = vmatprep.subr.bf16.mxu0 0
      %702 = vmatpush2.bf16.msra.mxu0 0
      %703 = vmatprep.subr.bf16.mxu0 0
      %704 = vmatpush2.bf16.msra.mxu0 0
      %705 = vmatprep.subr.bf16.mxu0 0
      %706 = vmatpush2.bf16.msra.mxu0 0
      %707 = vmatprep.subr.bf16.mxu0 0
      %708 = vmatpush2.bf16.msra.mxu0 0
      %709 = vmatprep.subr.bf16.mxu0 0
      %710 = vmatpush2.bf16.msra.mxu0 0
      %711 = vmatprep.mubr.bf16.mxu0 0
      %712 = vmatmul.mubr.bf16.gmra.mxu0 %v668
      %v713 = vpop.f32.mrf.mxu0
      %v714 = vadd.f32 0.0, %v713
      %v715 = vpop.f32.mrf.mxu0
      %v716 = vadd.f32 0.0, %v715
      %v717 = vpop.f32.mrf.mxu0
      %v718 = vpop.f32.mrf.mxu0
      %719 = vdwg.mxu0
      %720 = vmatprep.subr.bf16.mxu0 0
      %721 = vmatpush1.bf16.msra.mxu0 0
      %722 = vmatprep.subr.bf16.mxu0 0
      %723 = vmatpush1.bf16.msra.mxu0 0
      %724 = vmatprep.subr.bf16.mxu0 0
      %725 = vmatpush1.bf16.msra.mxu0 0
      %726 = vmatprep.subr.bf16.mxu0 0
      %727 = vmatpush1.bf16.msra.mxu0 0
      %728 = vmatprep.subr.bf16.mxu0 0
      %729 = vmatpush1.bf16.msra.mxu0 0
      %730 = vmatprep.subr.bf16.mxu0 0
      %731 = vmatpush1.bf16.msra.mxu0 0
      %732 = vmatprep.subr.bf16.mxu0 0
      %733 = vmatpush1.bf16.msra.mxu0 0
      %734 = vmatprep.subr.bf16.mxu0 0
      %735 = vmatpush1.bf16.msra.mxu0 %v677
      %736 = vmatprep.subr.bf16.mxu0 0
      %737 = vmatpush2.bf16.msra.mxu0 0
      %738 = vmatprep.subr.bf16.mxu0 0
      %739 = vmatpush2.bf16.msra.mxu0 0
      %740 = vmatprep.subr.bf16.mxu0 0
      %741 = vmatpush2.bf16.msra.mxu0 0
      %742 = vmatprep.subr.bf16.mxu0 0
      %743 = vmatpush2.bf16.msra.mxu0 0
      %744 = vmatprep.subr.bf16.mxu0 0
      %745 = vmatpush2.bf16.msra.mxu0 0
      %746 = vmatprep.subr.bf16.mxu0 0
      %747 = vmatpush2.bf16.msra.mxu0 0
      %748 = vmatprep.subr.bf16.mxu0 0
      %749 = vmatpush2.bf16.msra.mxu0 0
      %750 = vmatprep.subr.bf16.mxu0 0
      %751 = vmatpush2.bf16.msra.mxu0 0
      %752 = vmatprep.mubr.bf16.mxu0 0
      %753 = vmatmul.mubr.bf16.gmra.mxu0 %v668
      %v754 = vpop.f32.mrf.mxu0
      %v755 = vadd.f32 0.0, %v754
      %v756 = vpop.f32.mrf.mxu0
      %v757 = vpop.f32.mrf.mxu0
      %v758 = vpop.f32.mrf.mxu0
      %759 = vdwg.mxu0
      %v760 = vadd.f32 %v650, %v714
      %v761 = vadd.f32 %v651, %v716
      %v762 = vadd.f32 %v652, %v755
      %s763 = scalar_lea.vmem %s1, 20
      %v764 = vld [vmem:[%s763] sm:$0xf]
      %765 = vrot.lane.b32.xlu0 %v221, 108
      %v766 = vpop.permute.xlu0 %765
      %767 = vrot.lane.b32.xlu0 %v222, 108
      %v768 = vpop.permute.xlu0 %767
      %769 = vrot.lane.b32.xlu0 %v223, 108
      %v770 = vpop.permute.xlu0 %769
      %771 = vrot.lane.b32.xlu0 %v224, 108
      %v772 = vpop.permute.xlu0 %771
      %vm773 = vcmask 883712
      %v774 = vsel %vm773, %v766, %v768
      %v775 = vsel %vm773, %v768, %v770
      %v776 = vsel %vm773, %v770, %v772
      %v778 = vsel %vm237, %v764, 0
      %v781 = vsel %vm241, %v774, 0
      %v784 = vsel %vm241, %v775, 0
      %v787 = vsel %vm241, %v776, 0
      %789 = vmatprep.subr.bf16.mxu0 0
      %790 = vmatpush1.bf16.msra.mxu0 0
      %791 = vmatprep.subr.bf16.mxu0 0
      %792 = vmatpush1.bf16.msra.mxu0 0
      %793 = vmatprep.subr.bf16.mxu0 0
      %794 = vmatpush1.bf16.msra.mxu0 0
      %795 = vmatprep.subr.bf16.mxu0 0
      %796 = vmatpush1.bf16.msra.mxu0 0
      %797 = vmatprep.subr.bf16.mxu0 0
      %798 = vmatpush1.bf16.msra.mxu0 0
      %799 = vmatprep.subr.bf16.mxu0 0
      %800 = vmatpush1.bf16.msra.mxu0 0
      %801 = vmatprep.subr.bf16.mxu0 0
      %802 = vmatpush1.bf16.msra.mxu0 0
      %803 = vmatprep.subr.bf16.mxu0 %v784
      %804 = vmatpush1.bf16.msra.mxu0 %v781
      %805 = vmatprep.subr.bf16.mxu0 0
      %806 = vmatpush2.bf16.msra.mxu0 0
      %807 = vmatprep.subr.bf16.mxu0 0
      %808 = vmatpush2.bf16.msra.mxu0 0
      %809 = vmatprep.subr.bf16.mxu0 0
      %810 = vmatpush2.bf16.msra.mxu0 0
      %811 = vmatprep.subr.bf16.mxu0 0
      %812 = vmatpush2.bf16.msra.mxu0 0
      %813 = vmatprep.subr.bf16.mxu0 0
      %814 = vmatpush2.bf16.msra.mxu0 0
      %815 = vmatprep.subr.bf16.mxu0 0
      %816 = vmatpush2.bf16.msra.mxu0 0
      %817 = vmatprep.subr.bf16.mxu0 0
      %818 = vmatpush2.bf16.msra.mxu0 0
      %819 = vmatprep.subr.bf16.mxu0 0
      %820 = vmatpush2.bf16.msra.mxu0 0
      %821 = vmatprep.mubr.bf16.mxu0 0
      %822 = vmatmul.mubr.bf16.gmra.mxu0 %v778
      %v823 = vpop.f32.mrf.mxu0
      %v824 = vadd.f32 0.0, %v823
      %v825 = vpop.f32.mrf.mxu0
      %v826 = vadd.f32 0.0, %v825
      %v827 = vpop.f32.mrf.mxu0
      %v828 = vpop.f32.mrf.mxu0
      %829 = vdwg.mxu0
      %830 = vmatprep.subr.bf16.mxu0 0
      %831 = vmatpush1.bf16.msra.mxu0 0
      %832 = vmatprep.subr.bf16.mxu0 0
      %833 = vmatpush1.bf16.msra.mxu0 0
      %834 = vmatprep.subr.bf16.mxu0 0
      %835 = vmatpush1.bf16.msra.mxu0 0
      %836 = vmatprep.subr.bf16.mxu0 0
      %837 = vmatpush1.bf16.msra.mxu0 0
      %838 = vmatprep.subr.bf16.mxu0 0
      %839 = vmatpush1.bf16.msra.mxu0 0
      %840 = vmatprep.subr.bf16.mxu0 0
      %841 = vmatpush1.bf16.msra.mxu0 0
      %842 = vmatprep.subr.bf16.mxu0 0
      %843 = vmatpush1.bf16.msra.mxu0 0
      %844 = vmatprep.subr.bf16.mxu0 0
      %845 = vmatpush1.bf16.msra.mxu0 %v787
      %846 = vmatprep.subr.bf16.mxu0 0
      %847 = vmatpush2.bf16.msra.mxu0 0
      %848 = vmatprep.subr.bf16.mxu0 0
      %849 = vmatpush2.bf16.msra.mxu0 0
      %850 = vmatprep.subr.bf16.mxu0 0
      %851 = vmatpush2.bf16.msra.mxu0 0
      %852 = vmatprep.subr.bf16.mxu0 0
      %853 = vmatpush2.bf16.msra.mxu0 0
      %854 = vmatprep.subr.bf16.mxu0 0
      %855 = vmatpush2.bf16.msra.mxu0 0
      %856 = vmatprep.subr.bf16.mxu0 0
      %857 = vmatpush2.bf16.msra.mxu0 0
      %858 = vmatprep.subr.bf16.mxu0 0
      %859 = vmatpush2.bf16.msra.mxu0 0
      %860 = vmatprep.subr.bf16.mxu0 0
      %861 = vmatpush2.bf16.msra.mxu0 0
      %862 = vmatprep.mubr.bf16.mxu0 0
      %863 = vmatmul.mubr.bf16.gmra.mxu0 %v778
      %v864 = vpop.f32.mrf.mxu0
      %v865 = vadd.f32 0.0, %v864
      %v866 = vpop.f32.mrf.mxu0
      %v867 = vpop.f32.mrf.mxu0
      %v868 = vpop.f32.mrf.mxu0
      %869 = vdwg.mxu0
      %v870 = vadd.f32 %v760, %v824
      %v871 = vadd.f32 %v761, %v826
      %v872 = vadd.f32 %v762, %v865
      %s873 = scalar_lea.vmem %s1, 24
      %v874 = vld [vmem:[%s873] sm:$0xf]
      %875 = vrot.lane.b32.xlu0 %v221, 92
      %v876 = vpop.permute.xlu0 %875
      %877 = vrot.lane.b32.xlu0 %v222, 92
      %v878 = vpop.permute.xlu0 %877
      %879 = vrot.lane.b32.xlu0 %v223, 92
      %v880 = vpop.permute.xlu0 %879
      %881 = vrot.lane.b32.xlu0 %v224, 92
      %v882 = vpop.permute.xlu0 %881
      %vm883 = vcmask 752640
      %v884 = vsel %vm883, %v876, %v878
      %v885 = vsel %vm883, %v878, %v880
      %v886 = vsel %vm883, %v880, %v882
      %v888 = vsel %vm237, %v874, 0
      %v891 = vsel %vm241, %v884, 0
      %v894 = vsel %vm241, %v885, 0
      %v897 = vsel %vm241, %v886, 0
      %899 = vmatprep.subr.bf16.mxu0 0
      %900 = vmatpush1.bf16.msra.mxu0 0
      %901 = vmatprep.subr.bf16.mxu0 0
      %902 = vmatpush1.bf16.msra.mxu0 0
      %903 = vmatprep.subr.bf16.mxu0 0
      %904 = vmatpush1.bf16.msra.mxu0 0
      %905 = vmatprep.subr.bf16.mxu0 0
      %906 = vmatpush1.bf16.msra.mxu0 0
      %907 = vmatprep.subr.bf16.mxu0 0
      %908 = vmatpush1.bf16.msra.mxu0 0
      %909 = vmatprep.subr.bf16.mxu0 0
      %910 = vmatpush1.bf16.msra.mxu0 0
      %911 = vmatprep.subr.bf16.mxu0 0
      %912 = vmatpush1.bf16.msra.mxu0 0
      %913 = vmatprep.subr.bf16.mxu0 %v894
      %914 = vmatpush1.bf16.msra.mxu0 %v891
      %915 = vmatprep.subr.bf16.mxu0 0
      %916 = vmatpush2.bf16.msra.mxu0 0
      %917 = vmatprep.subr.bf16.mxu0 0
      %918 = vmatpush2.bf16.msra.mxu0 0
      %919 = vmatprep.subr.bf16.mxu0 0
      %920 = vmatpush2.bf16.msra.mxu0 0
      %921 = vmatprep.subr.bf16.mxu0 0
      %922 = vmatpush2.bf16.msra.mxu0 0
      %923 = vmatprep.subr.bf16.mxu0 0
      %924 = vmatpush2.bf16.msra.mxu0 0
      %925 = vmatprep.subr.bf16.mxu0 0
      %926 = vmatpush2.bf16.msra.mxu0 0
      %927 = vmatprep.subr.bf16.mxu0 0
      %928 = vmatpush2.bf16.msra.mxu0 0
      %929 = vmatprep.subr.bf16.mxu0 0
      %930 = vmatpush2.bf16.msra.mxu0 0
      %931 = vmatprep.mubr.bf16.mxu0 0
      %932 = vmatmul.mubr.bf16.gmra.mxu0 %v888
      %v933 = vpop.f32.mrf.mxu0
      %v934 = vadd.f32 0.0, %v933
      %v935 = vpop.f32.mrf.mxu0
      %v936 = vadd.f32 0.0, %v935
      %v937 = vpop.f32.mrf.mxu0
      %v938 = vpop.f32.mrf.mxu0
      %939 = vdwg.mxu0
      %940 = vmatprep.subr.bf16.mxu0 0
      %941 = vmatpush1.bf16.msra.mxu0 0
      %942 = vmatprep.subr.bf16.mxu0 0
      %943 = vmatpush1.bf16.msra.mxu0 0
      %944 = vmatprep.subr.bf16.mxu0 0
      %945 = vmatpush1.bf16.msra.mxu0 0
      %946 = vmatprep.subr.bf16.mxu0 0
      %947 = vmatpush1.bf16.msra.mxu0 0
      %948 = vmatprep.subr.bf16.mxu0 0
      %949 = vmatpush1.bf16.msra.mxu0 0
      %950 = vmatprep.subr.bf16.mxu0 0
      %951 = vmatpush1.bf16.msra.mxu0 0
      %952 = vmatprep.subr.bf16.mxu0 0
      %953 = vmatpush1.bf16.msra.mxu0 0
      %954 = vmatprep.subr.bf16.mxu0 0
      %955 = vmatpush1.bf16.msra.mxu0 %v897
      %956 = vmatprep.subr.bf16.mxu0 0
      %957 = vmatpush2.bf16.msra.mxu0 0
      %958 = vmatprep.subr.bf16.mxu0 0
      %959 = vmatpush2.bf16.msra.mxu0 0
      %960 = vmatprep.subr.bf16.mxu0 0
      %961 = vmatpush2.bf16.msra.mxu0 0
      %962 = vmatprep.subr.bf16.mxu0 0
      %963 = vmatpush2.bf16.msra.mxu0 0
      %964 = vmatprep.subr.bf16.mxu0 0
      %965 = vmatpush2.bf16.msra.mxu0 0
      %966 = vmatprep.subr.bf16.mxu0 0
      %967 = vmatpush2.bf16.msra.mxu0 0
      %968 = vmatprep.subr.bf16.mxu0 0
      %969 = vmatpush2.bf16.msra.mxu0 0
      %970 = vmatprep.subr.bf16.mxu0 0
      %971 = vmatpush2.bf16.msra.mxu0 0
      %972 = vmatprep.mubr.bf16.mxu0 0
      %973 = vmatmul.mubr.bf16.gmra.mxu0 %v888
      %v974 = vpop.f32.mrf.mxu0
      %v975 = vadd.f32 0.0, %v974
      %v976 = vpop.f32.mrf.mxu0
      %v977 = vpop.f32.mrf.mxu0
      %v978 = vpop.f32.mrf.mxu0
      %979 = vdwg.mxu0
      %v980 = vadd.f32 %v870, %v934
      %v981 = vadd.f32 %v871, %v936
      %v982 = vadd.f32 %v872, %v975
      %s983 = scalar_lea.vmem %s1, 28
      %v984 = vld [vmem:[%s983] sm:$0xf]
      %985 = vrot.lane.b32.xlu0 %v221, 91
      %v986 = vpop.permute.xlu0 %985
      %987 = vrot.lane.b32.xlu0 %v222, 91
      %v988 = vpop.permute.xlu0 %987
      %989 = vrot.lane.b32.xlu0 %v223, 91
      %v990 = vpop.permute.xlu0 %989
      %991 = vrot.lane.b32.xlu0 %v224, 91
      %v992 = vpop.permute.xlu0 %991
      %vm993 = vcmask 744448
      %v994 = vsel %vm993, %v986, %v988
      %v995 = vsel %vm993, %v988, %v990
      %v996 = vsel %vm993, %v990, %v992
      %v998 = vsel %vm237, %v984, 0
      %v1001 = vsel %vm241, %v994, 0
      %v1004 = vsel %vm241, %v995, 0
      %v1007 = vsel %vm241, %v996, 0
      %1009 = vmatprep.subr.bf16.mxu0 0
      %1010 = vmatpush1.bf16.msra.mxu0 0
      %1011 = vmatprep.subr.bf16.mxu0 0
      %1012 = vmatpush1.bf16.msra.mxu0 0
      %1013 = vmatprep.subr.bf16.mxu0 0
      %1014 = vmatpush1.bf16.msra.mxu0 0
      %1015 = vmatprep.subr.bf16.mxu0 0
      %1016 = vmatpush1.bf16.msra.mxu0 0
      %1017 = vmatprep.subr.bf16.mxu0 0
      %1018 = vmatpush1.bf16.msra.mxu0 0
      %1019 = vmatprep.subr.bf16.mxu0 0
      %1020 = vmatpush1.bf16.msra.mxu0 0
      %1021 = vmatprep.subr.bf16.mxu0 0
      %1022 = vmatpush1.bf16.msra.mxu0 0
      %1023 = vmatprep.subr.bf16.mxu0 %v1004
      %1024 = vmatpush1.bf16.msra.mxu0 %v1001
      %1025 = vmatprep.subr.bf16.mxu0 0
      %1026 = vmatpush2.bf16.msra.mxu0 0
      %1027 = vmatprep.subr.bf16.mxu0 0
      %1028 = vmatpush2.bf16.msra.mxu0 0
      %1029 = vmatprep.subr.bf16.mxu0 0
      %1030 = vmatpush2.bf16.msra.mxu0 0
      %1031 = vmatprep.subr.bf16.mxu0 0
      %1032 = vmatpush2.bf16.msra.mxu0 0
      %1033 = vmatprep.subr.bf16.mxu0 0
      %1034 = vmatpush2.bf16.msra.mxu0 0
      %1035 = vmatprep.subr.bf16.mxu0 0
      %1036 = vmatpush2.bf16.msra.mxu0 0
      %1037 = vmatprep.subr.bf16.mxu0 0
      %1038 = vmatpush2.bf16.msra.mxu0 0
      %1039 = vmatprep.subr.bf16.mxu0 0
      %1040 = vmatpush2.bf16.msra.mxu0 0
      %1041 = vmatprep.mubr.bf16.mxu0 0
      %1042 = vmatmul.mubr.bf16.gmra.mxu0 %v998
      %v1043 = vpop.f32.mrf.mxu0
      %v1044 = vadd.f32 0.0, %v1043
      %v1045 = vpop.f32.mrf.mxu0
      %v1046 = vadd.f32 0.0, %v1045
      %v1047 = vpop.f32.mrf.mxu0
      %v1048 = vpop.f32.mrf.mxu0
      %1049 = vdwg.mxu0
      %1050 = vmatprep.subr.bf16.mxu0 0
      %1051 = vmatpush1.bf16.msra.mxu0 0
      %1052 = vmatprep.subr.bf16.mxu0 0
      %1053 = vmatpush1.bf16.msra.mxu0 0
      %1054 = vmatprep.subr.bf16.mxu0 0
      %1055 = vmatpush1.bf16.msra.mxu0 0
      %1056 = vmatprep.subr.bf16.mxu0 0
      %1057 = vmatpush1.bf16.msra.mxu0 0
      %1058 = vmatprep.subr.bf16.mxu0 0
      %1059 = vmatpush1.bf16.msra.mxu0 0
      %1060 = vmatprep.subr.bf16.mxu0 0
      %1061 = vmatpush1.bf16.msra.mxu0 0
      %1062 = vmatprep.subr.bf16.mxu0 0
      %1063 = vmatpush1.bf16.msra.mxu0 0
      %1064 = vmatprep.subr.bf16.mxu0 0
      %1065 = vmatpush1.bf16.msra.mxu0 %v1007
      %1066 = vmatprep.subr.bf16.mxu0 0
      %1067 = vmatpush2.bf16.msra.mxu0 0
      %1068 = vmatprep.subr.bf16.mxu0 0
      %1069 = vmatpush2.bf16.msra.mxu0 0
      %1070 = vmatprep.subr.bf16.mxu0 0
      %1071 = vmatpush2.bf16.msra.mxu0 0
      %1072 = vmatprep.subr.bf16.mxu0 0
      %1073 = vmatpush2.bf16.msra.mxu0 0
      %1074 = vmatprep.subr.bf16.mxu0 0
      %1075 = vmatpush2.bf16.msra.mxu0 0
      %1076 = vmatprep.subr.bf16.mxu0 0
      %1077 = vmatpush2.bf16.msra.mxu0 0
      %1078 = vmatprep.subr.bf16.mxu0 0
      %1079 = vmatpush2.bf16.msra.mxu0 0
      %1080 = vmatprep.subr.bf16.mxu0 0
      %1081 = vmatpush2.bf16.msra.mxu0 0
      %1082 = vmatprep.mubr.bf16.mxu0 0
      %1083 = vmatmul.mubr.bf16.gmra.mxu0 %v998
      %v1084 = vpop.f32.mrf.mxu0
      %v1085 = vadd.f32 0.0, %v1084
      %v1086 = vpop.f32.mrf.mxu0
      %v1087 = vpop.f32.mrf.mxu0
      %v1088 = vpop.f32.mrf.mxu0
      %1089 = vdwg.mxu0
      %v1090 = vadd.f32 %v980, %v1044
      %v1091 = vadd.f32 %v981, %v1046
      %v1092 = vadd.f32 %v982, %v1085
      %s1093 = scalar_lea.vmem %s1, 32
      %v1094 = vld [vmem:[%s1093] sm:$0xf]
      %1095 = vrot.lane.b32.xlu0 %v221, 90
      %v1096 = vpop.permute.xlu0 %1095
      %1097 = vrot.lane.b32.xlu0 %v222, 90
      %v1098 = vpop.permute.xlu0 %1097
      %1099 = vrot.lane.b32.xlu0 %v223, 90
      %v1100 = vpop.permute.xlu0 %1099
      %1101 = vrot.lane.b32.xlu0 %v224, 90
      %v1102 = vpop.permute.xlu0 %1101
      %vm1103 = vcmask 736256
      %v1104 = vsel %vm1103, %v1096, %v1098
      %v1105 = vsel %vm1103, %v1098, %v1100
      %v1106 = vsel %vm1103, %v1100, %v1102
      %v1108 = vsel %vm237, %v1094, 0
      %v1111 = vsel %vm241, %v1104, 0
      %v1114 = vsel %vm241, %v1105, 0
      %v1117 = vsel %vm241, %v1106, 0
      %1119 = vmatprep.subr.bf16.mxu0 0
      %1120 = vmatpush1.bf16.msra.mxu0 0
      %1121 = vmatprep.subr.bf16.mxu0 0
      %1122 = vmatpush1.bf16.msra.mxu0 0
      %1123 = vmatprep.subr.bf16.mxu0 0
      %1124 = vmatpush1.bf16.msra.mxu0 0
      %1125 = vmatprep.subr.bf16.mxu0 0
      %1126 = vmatpush1.bf16.msra.mxu0 0
      %1127 = vmatprep.subr.bf16.mxu0 0
      %1128 = vmatpush1.bf16.msra.mxu0 0
      %1129 = vmatprep.subr.bf16.mxu0 0
      %1130 = vmatpush1.bf16.msra.mxu0 0
      %1131 = vmatprep.subr.bf16.mxu0 0
      %1132 = vmatpush1.bf16.msra.mxu0 0
      %1133 = vmatprep.subr.bf16.mxu0 %v1114
      %1134 = vmatpush1.bf16.msra.mxu0 %v1111
      %1135 = vmatprep.subr.bf16.mxu0 0
      %1136 = vmatpush2.bf16.msra.mxu0 0
      %1137 = vmatprep.subr.bf16.mxu0 0
      %1138 = vmatpush2.bf16.msra.mxu0 0
      %1139 = vmatprep.subr.bf16.mxu0 0
      %1140 = vmatpush2.bf16.msra.mxu0 0
      %1141 = vmatprep.subr.bf16.mxu0 0
      %1142 = vmatpush2.bf16.msra.mxu0 0
      %1143 = vmatprep.subr.bf16.mxu0 0
      %1144 = vmatpush2.bf16.msra.mxu0 0
      %1145 = vmatprep.subr.bf16.mxu0 0
      %1146 = vmatpush2.bf16.msra.mxu0 0
      %1147 = vmatprep.subr.bf16.mxu0 0
      %1148 = vmatpush2.bf16.msra.mxu0 0
      %1149 = vmatprep.subr.bf16.mxu0 0
      %1150 = vmatpush2.bf16.msra.mxu0 0
      %1151 = vmatprep.mubr.bf16.mxu0 0
      %1152 = vmatmul.mubr.bf16.gmra.mxu0 %v1108
      %v1153 = vpop.f32.mrf.mxu0
      %v1154 = vadd.f32 0.0, %v1153
      %v1155 = vpop.f32.mrf.mxu0
      %v1156 = vadd.f32 0.0, %v1155
      %v1157 = vpop.f32.mrf.mxu0
      %v1158 = vpop.f32.mrf.mxu0
      %1159 = vdwg.mxu0
      %1160 = vmatprep.subr.bf16.mxu0 0
      %1161 = vmatpush1.bf16.msra.mxu0 0
      %1162 = vmatprep.subr.bf16.mxu0 0
      %1163 = vmatpush1.bf16.msra.mxu0 0
      %1164 = vmatprep.subr.bf16.mxu0 0
      %1165 = vmatpush1.bf16.msra.mxu0 0
      %1166 = vmatprep.subr.bf16.mxu0 0
      %1167 = vmatpush1.bf16.msra.mxu0 0
      %1168 = vmatprep.subr.bf16.mxu0 0
      %1169 = vmatpush1.bf16.msra.mxu0 0
      %1170 = vmatprep.subr.bf16.mxu0 0
      %1171 = vmatpush1.bf16.msra.mxu0 0
      %1172 = vmatprep.subr.bf16.mxu0 0
      %1173 = vmatpush1.bf16.msra.mxu0 0
      %1174 = vmatprep.subr.bf16.mxu0 0
      %1175 = vmatpush1.bf16.msra.mxu0 %v1117
      %1176 = vmatprep.subr.bf16.mxu0 0
      %1177 = vmatpush2.bf16.msra.mxu0 0
      %1178 = vmatprep.subr.bf16.mxu0 0
      %1179 = vmatpush2.bf16.msra.mxu0 0
      %1180 = vmatprep.subr.bf16.mxu0 0
      %1181 = vmatpush2.bf16.msra.mxu0 0
      %1182 = vmatprep.subr.bf16.mxu0 0
      %1183 = vmatpush2.bf16.msra.mxu0 0
      %1184 = vmatprep.subr.bf16.mxu0 0
      %1185 = vmatpush2.bf16.msra.mxu0 0
      %1186 = vmatprep.subr.bf16.mxu0 0
      %1187 = vmatpush2.bf16.msra.mxu0 0
      %1188 = vmatprep.subr.bf16.mxu0 0
      %1189 = vmatpush2.bf16.msra.mxu0 0
      %1190 = vmatprep.subr.bf16.mxu0 0
      %1191 = vmatpush2.bf16.msra.mxu0 0
      %1192 = vmatprep.mubr.bf16.mxu0 0
      %1193 = vmatmul.mubr.bf16.gmra.mxu0 %v1108
      %v1194 = vpop.f32.mrf.mxu0
      %v1195 = vadd.f32 0.0, %v1194
      %v1196 = vpop.f32.mrf.mxu0
      %v1197 = vpop.f32.mrf.mxu0
      %v1198 = vpop.f32.mrf.mxu0
      %1199 = vdwg.mxu0
      %v1200 = vadd.f32 %v1090, %v1154
      %v1201 = vadd.f32 %v1091, %v1156
      %v1202 = vadd.f32 %v1092, %v1195
      %v1203 = vld [vmem:[%s2] sm:$0x7]
      %v1205 = vlaneseq
      %v1206 = vshrl.u32 %v1205, 7
      %v1207 = vsub.s32 0, %v1206
      %v1208 = vrot.slane %v1203, %v1207
      %v1209 = vlaneseq
      %v1210 = vshrl.u32 %v1209, 7
      %v1211 = vsub.s32 1, %v1210
      %v1212 = vrot.slane %v1203, %v1211
      %v1213 = vlaneseq
      %v1214 = vshrl.u32 %v1213, 7
      %v1215 = vsub.s32 2, %v1214
      %v1216 = vrot.slane %v1203, %v1215
      %v1220 = vmul.f32 %v1200, %v1208
      %v1221 = vmul.f32 %v1201, %v1212
      %v1222 = vmul.f32 %v1202, %v1216
      %v1223 = vadd.f32 %v1220, %v1221
      %v1224 = vadd.f32 %v1223, %v1222
      %1225 = vadd.xlane.f32.xlu0 %v1224
      %v1226 = vpop.xlane.xlu0 %1225
      %vm1227 = vcmask 7168
      %1228 = vst.msk [vmem:[%s202] sm:$0xff] %vm1227, %v1226
      %v1229 = vmul.f32 %v1220, %v1200
      %v1230 = vmul.f32 %v1221, %v1201
      %v1231 = vmul.f32 %v1222, %v1202
      %v1232 = vadd.f32 %v1229, %v1230
      %v1233 = vadd.f32 %v1232, %v1231
      %1234 = vadd.xlane.f32.xlu0 %v1233
      %v1235 = vpop.xlane.xlu0 %1234
      %1236 = vst.msk [vmem:[%s206] sm:$0xff] %vm1227, %v1235
      %p1237 = scmp.lt.s32.totalorder %s16, 1
      %s1238 = scalar_select %p1237, %s16, 1
      %s1239 = smul.addr %s1238, 8
      %s1240 = scalar_lea.vmem %s3, %s1239
      %p1241 = scmp.lt.s32.totalorder %s16, 1
      %s1242 = scalar_select %p1241, %s16, 1
      %s1243 = smul.addr %s1242, 8
      %s1244 = scalar_lea.vmem %s4, %s1243
      // Predicated region
      $region33: #{conv_bn_relu_forward.2} parent=31 // pred_check
        %p1245 = pneg %p102
      $region34: #{conv_bn_relu_forward.2} parent=31 // pred_check_branch
        %1247 = sbr.rel (%p1245) target = $region36
      $region35: #{conv_bn_relu_forward.2} parent=31 // pred_region
        _
      $region36: #{conv_bn_relu_forward.2} parent=31 // pred_fallthru
        _
      // Predicated region
      $region37: #{conv_bn_relu_forward.2} parent=31 // pred_check
        %p1248 = pneg %p128
      $region38: #{conv_bn_relu_forward.2} parent=31 // pred_check_branch
        %1250 = sbr.rel (%p1248) target = $region40
      $region39: #{conv_bn_relu_forward.2} parent=31 // pred_region
        _
      $region40: #{conv_bn_relu_forward.2} parent=31 // pred_fallthru
        _
    $region32: #{conv_bn_relu_forward.2} parent=5 // pred_fallthru
      _
    %p1251 = scmp.le.s32.totalorder 2, %s11
    // Predicated region
    $region41: #{conv_bn_relu_forward.2} parent=5 // pred_check
      %p1252 = pneg %p1251
    $region42: #{conv_bn_relu_forward.2} parent=5 // pred_check_branch
      %1254 = sbr.rel (%p1252) target = $region44
    $region43: #{conv_bn_relu_forward.2} parent=5 // pred_region
      %s1255 = ssub.s32 %s11, 2
      // Predicated region
      $region45: #{conv_bn_relu_forward.2} parent=43 // pred_check
        %p1256 = pneg %p108
      $region46: #{conv_bn_relu_forward.2} parent=43 // pred_check_branch
        %1258 = sbr.rel (%p1256) target = $region48
      $region47: #{conv_bn_relu_forward.2} parent=43 // pred_region
        %p1259 = scmp.lt.s32.totalorder %s17, 1
        %s1260 = scalar_select %p1259, %s17, 1
        %s1261 = smul.addr %s1260, 8
        %s1262 = scalar_lea.vmem %s3, %s1261
      $region48: #{conv_bn_relu_forward.2} parent=43 // pred_fallthru
        _
      // Predicated region
      $region49: #{conv_bn_relu_forward.2} parent=43 // pred_check
        %p1263 = pneg %p134
      $region50: #{conv_bn_relu_forward.2} parent=43 // pred_check_branch
        %1265 = sbr.rel (%p1263) target = $region52
      $region51: #{conv_bn_relu_forward.2} parent=43 // pred_region
        %p1266 = scmp.lt.s32.totalorder %s17, 1
        %s1267 = scalar_select %p1266, %s17, 1
        %s1268 = smul.addr %s1267, 8
        %s1269 = scalar_lea.vmem %s4, %s1268
      $region52: #{conv_bn_relu_forward.2} parent=43 // pred_fallthru
        _
    $region44: #{conv_bn_relu_forward.2} parent=5 // pred_fallthru
      _
  $region6: #{conv_bn_relu_forward.2} parent=0 // loop_footer
    %s15 = sadd.s32 1, %s11
  $region7: #{conv_bn_relu_forward.2} parent=0 // loop_footer_branch
    %10 = sbr.rel target = $region3
  $region8: #{conv_bn_relu_forward.2} parent=0 // loop_exit
    _

// kernel: conv_bn_relu_forward.3
$region0: #{conv_bn_relu_forward.3}
  #allocation0 [shape = 'u32[]', space=smem, size = 0x4, offset = 0x4, fixed_abs, tag = 'smem constant byte address 0x4 - core index']
  #allocation1 [shape = 'u32[144,128]{1,0:T(1,128)}', space=vmem, size = 0x12000, scoped, tag = 'internal scratch']
  %s0 = inlined_call_operand.vmem [shape: bf16[2,8,512], index: 0, kind: input, shape index: {}]
  %s1 = inlined_call_operand.vmem [shape: bf16[9,8,8], index: 1, kind: input, shape index: {}]
  %s2 = inlined_call_operand.vmem [shape: f32[8,1], index: 2, kind: input, shape index: {}]
  %s3 = inlined_call_operand.vmem [shape: f32[8,1], index: 3, kind: input, shape index: {}]
  %s4 = inlined_call_operand.vmem [shape: f32[2,8,384], index: 4, kind: output, shape index: {}]
  %s5 = sld [smem:[#allocation0]]
  $region49: #{conv_bn_relu_forward.3} parent=0
    _
  %s7 = ssub.s32 1, %s5
  %s8 = scalar_select 0, %s7, %s5
  loop: start=0, step=1, limit=4
  $region2: #{conv_bn_relu_forward.3} parent=0 // loop_pre_header
    _
  $region3: #{conv_bn_relu_forward.3} parent=0 // loop_header
    %s10 = sphi 0, %s14
    %p11 = scmp.ge.s32.totalorder %s10, 4
    %s20 = sphi 0, %s22
    %s23 = sphi 0, %s20
    %s24 = sphi 0, %s23
    %s40 = sphi 0, %s24
    %s44 = sphi 0, %s44
    %s46 = sphi 0, %s44
    %s47 = sphi 0, %s46
    %s61 = sphi 0, %s47
    %s65 = sphi 0, %s65
    %s67 = sphi 0, %s65
    %s68 = sphi 0, %s67
    %s82 = sphi 0, %s68
    %s86 = sphi 0, %s86
    %s88 = sphi 0, %s86
    %s89 = sphi 0, %s88
    %s103 = sphi 0, %s89
    %s109 = sphi 0, %s111
    %s112 = sphi 0, %s109
    %s113 = sphi 0, %s112
    %s129 = sphi 0, %s113
  $region4: #{conv_bn_relu_forward.3} parent=0 // loop_header_branch
    %13 = sbr.rel (%p11) target = $region8
  $region5: #{conv_bn_relu_forward.3} parent=0 // loop_body
    %s15 = ssub.s32 %s10, 1
    %s16 = ssub.s32 %s10, 2
    %s17 = sadd.s32 %s10, 1
    %s18 = ssub.s32 %s10, %s17
    %p19 = scmp.eq.s32.totalorder %s18, 0
    %s21 = sadd.s32 %s20, 1
    %s22 = scalar_select %p19, %s20, %s21
    %p25 = pneg %p19
    %p26 = scmp.eq.s32.totalorder %s10, 1
    %p27 = por %p25, %p26
    %p28 = scmp.ne.s32.totalorder %s20, %s23
    %p29 = scmp.eq.s32.totalorder %s10, 0
    %p30 = por %p28, %p29
    %p31 = scmp.ne.s32.totalorder %s20, %s23
    %p32 = scmp.eq.s32.totalorder %s15, 1
    %p33 = por %p31, %p32
    %p34 = scmp.ne.s32.totalorder %s23, %s24
    %p35 = scmp.eq.s32.totalorder %s15, 0
    %p36 = por %p34, %p35
    %p37 = scmp.ne.s32.totalorder %s23, %s24
    %p38 = scmp.eq.s32.totalorder %s16, 1
    %p39 = por %p37, %p38
    %p41 = scmp.ne.s32.totalorder %s24, %s40
    %p42 = scmp.eq.s32.totalorder %s16, 0
    %p43 = por %p41, %p42
    %s45 = sadd.s32 %s44, 1
    %p48 = scmp.eq.s32.totalorder %s10, 1
    %p49 = scmp.ne.s32.totalorder %s44, %s46
    %p50 = scmp.eq.s32.totalorder %s10, 0
    %p51 = por %p49, %p50
    %p52 = scmp.ne.s32.totalorder %s44, %s46
    %p53 = scmp.eq.s32.totalorder %s15, 1
    %p54 = por %p52, %p53
    %p55 = scmp.ne.s32.totalorder %s46, %s47
    %p56 = scmp.eq.s32.totalorder %s15, 0
    %p57 = por %p55, %p56
    %p58 = scmp.ne.s32.totalorder %s46, %s47
    %p59 = scmp.eq.s32.totalorder %s16, 1
    %p60 = por %p58, %p59
    %p62 = scmp.ne.s32.totalorder %s47, %s61
    %p63 = scmp.eq.s32.totalorder %s16, 0
    %p64 = por %p62, %p63
    %s66 = sadd.s32 %s65, 1
    %p69 = scmp.eq.s32.totalorder %s10, 1
    %p70 = scmp.ne.s32.totalorder %s65, %s67
    %p71 = scmp.eq.s32.totalorder %s10, 0
    %p72 = por %p70, %p71
    %p73 = scmp.ne.s32.totalorder %s65, %s67
    %p74 = scmp.eq.s32.totalorder %s15, 1
    %p75 = por %p73, %p74
    %p76 = scmp.ne.s32.totalorder %s67, %s68
    %p77 = scmp.eq.s32.totalorder %s15, 0
    %p78 = por %p76, %p77
    %p79 = scmp.ne.s32.totalorder %s67, %s68
    %p80 = scmp.eq.s32.totalorder %s16, 1
    %p81 = por %p79, %p80
    %p83 = scmp.ne.s32.totalorder %s68, %s82
    %p84 = scmp.eq.s32.totalorder %s16, 0
    %p85 = por %p83, %p84
    %s87 = sadd.s32 %s86, 1
    %p90 = scmp.eq.s32.totalorder %s10, 1
    %p91 = scmp.ne.s32.totalorder %s86, %s88
    %p92 = scmp.eq.s32.totalorder %s10, 0
    %p93 = por %p91, %p92
    %p94 = scmp.ne.s32.totalorder %s86, %s88
    %p95 = scmp.eq.s32.totalorder %s15, 1
    %p96 = por %p94, %p95
    %p97 = scmp.ne.s32.totalorder %s88, %s89
    %p98 = scmp.eq.s32.totalorder %s15, 0
    %p99 = por %p97, %p98
    %p100 = scmp.ne.s32.totalorder %s88, %s89
    %p101 = scmp.eq.s32.totalorder %s16, 1
    %p102 = por %p100, %p101
    %p104 = scmp.ne.s32.totalorder %s89, %s103
    %p105 = scmp.eq.s32.totalorder %s16, 0
    %p106 = por %p104, %p105
    %s107 = ssub.s32 %s10, %s17
    %p108 = scmp.eq.s32.totalorder %s107, 0
    %s110 = sadd.s32 %s109, 1
    %s111 = scalar_select %p108, %s109, %s110
    %p114 = pneg %p108
    %p115 = scmp.eq.s32.totalorder %s10, 1
    %p116 = por %p114, %p115
    %p117 = scmp.ne.s32.totalorder %s109, %s112
    %p118 = scmp.eq.s32.totalorder %s10, 0
    %p119 = por %p117, %p118
    %p120 = scmp.ne.s32.totalorder %s109, %s112
    %p121 = scmp.eq.s32.totalorder %s15, 1
    %p122 = por %p120, %p121
    %p123 = scmp.ne.s32.totalorder %s112, %s113
    %p124 = scmp.eq.s32.totalorder %s15, 0
    %p125 = por %p123, %p124
    %p126 = scmp.ne.s32.totalorder %s112, %s113
    %p127 = scmp.eq.s32.totalorder %s16, 1
    %p128 = por %p126, %p127
    %p130 = scmp.ne.s32.totalorder %s113, %s129
    %p131 = scmp.eq.s32.totalorder %s16, 0
    %p132 = por %p130, %p131
    %p133 = scmp.le.s32.totalorder 1, %s10
    %p134 = scmp.lt.s32.totalorder %s10, 3
    %p135 = pnand %p133, %p134
    %p136 = pneg %p135
    // Predicated region
    $region9: #{conv_bn_relu_forward.3} parent=5 // pred_check
      _
    $region10: #{conv_bn_relu_forward.3} parent=5 // pred_check_branch
      %138 = sbr.rel (%p135) target = $region12
    $region11: #{conv_bn_relu_forward.3} parent=5 // pred_region
      %s139 = ssub.s32 %s10, 1
      // Predicated region
      $region13: #{conv_bn_relu_forward.3} parent=11 // pred_check
        %p140 = pneg %p57
      $region14: #{conv_bn_relu_forward.3} parent=11 // pred_check_branch
        %142 = sbr.rel (%p140) target = $region16
      $region15: #{conv_bn_relu_forward.3} parent=11 // pred_region
        _
      $region16: #{conv_bn_relu_forward.3} parent=11 // pred_fallthru
        _
      // Predicated region
      $region17: #{conv_bn_relu_forward.3} parent=11 // pred_check
        %p143 = pneg %p78
      $region18: #{conv_bn_relu_forward.3} parent=11 // pred_check_branch
        %145 = sbr.rel (%p143) target = $region20
      $region19: #{conv_bn_relu_forward.3} parent=11 // pred_region
        _
      $region20: #{conv_bn_relu_forward.3} parent=11 // pred_fallthru
        _
      // Predicated region
      $region21: #{conv_bn_relu_forward.3} parent=11 // pred_check
        %p146 = pneg %p99
      $region22: #{conv_bn_relu_forward.3} parent=11 // pred_check_branch
        %148 = sbr.rel (%p146) target = $region24
      $region23: #{conv_bn_relu_forward.3} parent=11 // pred_region
        _
      $region24: #{conv_bn_relu_forward.3} parent=11 // pred_fallthru
        _
    $region12: #{conv_bn_relu_forward.3} parent=5 // pred_fallthru
      _
    %p149 = scmp.lt.s32.totalorder %s10, 2
    // Predicated region
    $region25: #{conv_bn_relu_forward.3} parent=5 // pred_check
      %p150 = pneg %p149
    $region26: #{conv_bn_relu_forward.3} parent=5 // pred_check_branch
      %152 = sbr.rel (%p150) target = $region28
    $region27: #{conv_bn_relu_forward.3} parent=5 // pred_region
      // Predicated region
      $region29: #{conv_bn_relu_forward.3} parent=27 // pred_check
        %p153 = pneg %p30
      $region30: #{conv_bn_relu_forward.3} parent=27 // pred_check_branch
        %155 = sbr.rel (%p153) target = $region32
      $region31: #{conv_bn_relu_forward.3} parent=27 // pred_region
        %p156 = scmp.lt.s32.totalorder %s10, 1
        %s157 = scalar_select %p156, %s10, 1
        %s158 = smul.addr %s157, 4
        %s159 = smul.addr %s158, 4
        %s160 = scalar_lea.vmem %s0, %s159
      $region32: #{conv_bn_relu_forward.3} parent=27 // pred_fallthru
        _
    $region28: #{conv_bn_relu_forward.3} parent=5 // pred_fallthru
      _
    %p161 = scmp.le.s32.totalorder 1, %s10
    %p162 = scmp.lt.s32.totalorder %s10, 3
    %p163 = pnand %p161, %p162
    %p164 = pneg %p163
    // Predicated region
    $region33: #{conv_bn_relu_forward.3} parent=5 // pred_check
      _
    $region34: #{conv_bn_relu_forward.3} parent=5 // pred_check_branch
      %166 = sbr.rel (%p163) target = $region36
    $region35: #{conv_bn_relu_forward.3} parent=5 // pred_region
      %s167 = ssub.s32 %s10, 1
      %p168 = scmp.lt.s32.totalorder %s15, 1
      %s169 = scalar_select %p168, %s15, 1
      %s170 = smul.addr %s169, 4
      %s171 = smul.addr %s170, 4
      %s172 = scalar_lea.vmem %s0, %s171
      %p173 = pneg %p36
      %p174 = pneg %p33
      %p175 = pneg %p57
      %p176 = pneg %p54
      %p177 = pneg %p78
      %p178 = pneg %p75
      %p179 = pneg %p99
      %p180 = pneg %p96
      %p181 = pneg %p125
      %p182 = pneg %p122
      %p183 = scmp.lt.s32.totalorder %s15, 1
      %s184 = scalar_select %p183, %s15, 1
      %s185 = smul.addr %s184, 3
      %s186 = smul.addr %s185, 8
      %s187 = scalar_lea.vmem %s4, %s186
      %p188 = scmp.lt.s32.totalorder %s15, 1
      %s189 = scalar_select %p188, %s15, 1
      %s190 = smul.addr %s189, 4
      %s191 = smul.addr %s190, 4
      %s192 = scalar_lea.vmem %s0, %s191
      %p193 = scmp.lt.s32.totalorder %s15, 1
      %s194 = scalar_select %p193, %s15, 1
      %s195 = smul.addr %s194, 3
      %s196 = smul.addr %s195, 8
      %s197 = scalar_lea.vmem %s4, %s196
      %v199 = vld [vmem:[%s1] sm:$0xf]
      %v200 = vld [vmem:[%s192] sm:$0xff]
      %v201 = vld [vmem:[%s192 + $0x8] sm:$0xf]
      %s202 = scalar_lea.vmem %s1, 4
      %v203 = vld [vmem:[%s202] sm:$0xf]
      %v204 = vld [vmem:[%s192] sm:$0xff]
      %v205 = vld [vmem:[%s192 + $0x8] sm:$0xff]
      %v208 = vunpack.c.l.b16 %v204
      %v209 = vunpack.c.h.b16 %v204
      %v210 = vunpack.c.l.b16 %v205
      %v211 = vunpack.c.h.b16 %v205
      %v212 = vpack.c.b16 %v208, %v208
      %v213 = vpack.c.b16 %v209, %v209
      %v214 = vpack.c.b16 %v210, %v210
      %v215 = vpack.c.b16 %v211, %v211
      %216 = vrot.lane.b32.xlu0 %v212, 127
      %v217 = vpop.permute.xlu0 %216
      %218 = vrot.lane.b32.xlu0 %v213, 127
      %v219 = vpop.permute.xlu0 %218
      %220 = vrot.lane.b32.xlu0 %v214, 127
      %v221 = vpop.permute.xlu0 %220
      %222 = vrot.lane.b32.xlu0 %v215, 127
      %v223 = vpop.permute.xlu0 %222
      %vm224 = vcmask 1039360
      %v225 = vsel %vm224, %v217, %v219
      %v226 = vsel %vm224, %v219, %v221
      %v227 = vsel %vm224, %v221, %v223
      %vm228 = vcmask 64512
      %v230 = vsel %vm228, %v203, 0
      %vm232 = vcmask 1043456
      %v234 = vsel %vm232, %v225, 0
      %v237 = vsel %vm232, %v226, 0
      %v240 = vsel %vm232, %v227, 0
      %242 = vmatprep.subr.bf16.mxu0 0
      %243 = vmatpush1.bf16.msra.mxu0 0
      %244 = vmatprep.subr.bf16.mxu0 0
      %245 = vmatpush1.bf16.msra.mxu0 0
      %246 = vmatprep.subr.bf16.mxu0 0
      %247 = vmatpush1.bf16.msra.mxu0 0
      %248 = vmatprep.subr.bf16.mxu0 0
      %249 = vmatpush1.bf16.msra.mxu0 0
      %250 = vmatprep.subr.bf16.mxu0 0
      %251 = vmatpush1.bf16.msra.mxu0 0
      %252 = vmatprep.subr.bf16.mxu0 0
      %253 = vmatpush1.bf16.msra.mxu0 0
      %254 = vmatprep.subr.bf16.mxu0 0
      %255 = vmatpush1.bf16.msra.mxu0 0
      %256 = vmatprep.subr.bf16.mxu0 %v237
      %257 = vmatpush1.bf16.msra.mxu0 %v234
      %258 = vmatprep.subr.bf16.mxu0 0
      %259 = vmatpush2.bf16.msra.mxu0 0
      %260 = vmatprep.subr.bf16.mxu0 0
      %261 = vmatpush2.bf16.msra.mxu0 0
      %262 = vmatprep.subr.bf16.mxu0 0
      %263 = vmatpush2.bf16.msra.mxu0 0
      %264 = vmatprep.subr.bf16.mxu0 0
      %265 = vmatpush2.bf16.msra.mxu0 0
      %266 = vmatprep.subr.bf16.mxu0 0
      %267 = vmatpush2.bf16.msra.mxu0 0
      %268 = vmatprep.subr.bf16.mxu0 0
      %269 = vmatpush2.bf16.msra.mxu0 0
      %270 = vmatprep.subr.bf16.mxu0 0
      %271 = vmatpush2.bf16.msra.mxu0 0
      %272 = vmatprep.subr.bf16.mxu0 0
      %273 = vmatpush2.bf16.msra.mxu0 0
      %274 = vmatprep.mubr.bf16.mxu0 0
      %275 = vmatmul.mubr.bf16.gmra.mxu0 %v230
      %v276 = vpop.f32.mrf.mxu0
      %v277 = vadd.f32 0.0, %v276
      %v278 = vpop.f32.mrf.mxu0
      %v279 = vadd.f32 0.0, %v278
      %v280 = vpop.f32.mrf.mxu0
      %v281 = vpop.f32.mrf.mxu0
      %282 = vdwg.mxu0
      %283 = vmatprep.subr.bf16.mxu0 0
      %284 = vmatpush1.bf16.msra.mxu0 0
      %285 = vmatprep.subr.bf16.mxu0 0
      %286 = vmatpush1.bf16.msra.mxu0 0
      %287 = vmatprep.subr.bf16.mxu0 0
      %288 = vmatpush1.bf16.msra.mxu0 0
      %289 = vmatprep.subr.bf16.mxu0 0
      %290 = vmatpush1.bf16.msra.mxu0 0
      %291 = vmatprep.subr.bf16.mxu0 0
      %292 = vmatpush1.bf16.msra.mxu0 0
      %293 = vmatprep.subr.bf16.mxu0 0
      %294 = vmatpush1.bf16.msra.mxu0 0
      %295 = vmatprep.subr.bf16.mxu0 0
      %296 = vmatpush1.bf16.msra.mxu0 0
      %297 = vmatprep.subr.bf16.mxu0 0
      %298 = vmatpush1.bf16.msra.mxu0 %v240
      %299 = vmatprep.subr.bf16.mxu0 0
      %300 = vmatpush2.bf16.msra.mxu0 0
      %301 = vmatprep.subr.bf16.mxu0 0
      %302 = vmatpush2.bf16.msra.mxu0 0
      %303 = vmatprep.subr.bf16.mxu0 0
      %304 = vmatpush2.bf16.msra.mxu0 0
      %305 = vmatprep.subr.bf16.mxu0 0
      %306 = vmatpush2.bf16.msra.mxu0 0
      %307 = vmatprep.subr.bf16.mxu0 0
      %308 = vmatpush2.bf16.msra.mxu0 0
      %309 = vmatprep.subr.bf16.mxu0 0
      %310 = vmatpush2.bf16.msra.mxu0 0
      %311 = vmatprep.subr.bf16.mxu0 0
      %312 = vmatpush2.bf16.msra.mxu0 0
      %313 = vmatprep.subr.bf16.mxu0 0
      %314 = vmatpush2.bf16.msra.mxu0 0
      %315 = vmatprep.mubr.bf16.mxu0 0
      %316 = vmatmul.mubr.bf16.gmra.mxu0 %v230
      %v317 = vpop.f32.mrf.mxu0
      %v318 = vadd.f32 0.0, %v317
      %v319 = vpop.f32.mrf.mxu0
      %v320 = vpop.f32.mrf.mxu0
      %v321 = vpop.f32.mrf.mxu0
      %322 = vdwg.mxu0
      %v325 = vunpack.c.l.b16 %v200
      %v326 = vunpack.c.h.b16 %v200
      %v327 = vunpack.c.l.b16 %v201
      %v328 = vpack.c.b16 %v325, %v325
      %v329 = vpack.c.b16 %v326, %v326
      %v330 = vpack.c.b16 %v327, %v327
      %v332 = vsel %vm228, %v199, 0
      %v335 = vsel %vm232, %v328, 0
      %v338 = vsel %vm232, %v329, 0
      %v341 = vsel %vm232, %v330, 0
      %343 = vmatprep.subr.bf16.mxu0 0
      %344 = vmatpush1.bf16.msra.mxu0 0
      %345 = vmatprep.subr.bf16.mxu0 0
      %346 = vmatpush1.bf16.msra.mxu0 0
      %347 = vmatprep.subr.bf16.mxu0 0
      %348 = vmatpush1.bf16.msra.mxu0 0
      %349 = vmatprep.subr.bf16.mxu0 0
      %350 = vmatpush1.bf16.msra.mxu0 0
      %351 = vmatprep.subr.bf16.mxu0 0
      %352 = vmatpush1.bf16.msra.mxu0 0
      %353 = vmatprep.subr.bf16.mxu0 0
      %354 = vmatpush1.bf16.msra.mxu0 0
      %355 = vmatprep.subr.bf16.mxu0 0
      %356 = vmatpush1.bf16.msra.mxu0 0
      %357 = vmatprep.subr.bf16.mxu0 %v338
      %358 = vmatpush1.bf16.msra.mxu0 %v335
      %359 = vmatprep.subr.bf16.mxu0 0
      %360 = vmatpush2.bf16.msra.mxu0 0
      %361 = vmatprep.subr.bf16.mxu0 0
      %362 = vmatpush2.bf16.msra.mxu0 0
      %363 = vmatprep.subr.bf16.mxu0 0
      %364 = vmatpush2.bf16.msra.mxu0 0
      %365 = vmatprep.subr.bf16.mxu0 0
      %366 = vmatpush2.bf16.msra.mxu0 0
      %367 = vmatprep.subr.bf16.mxu0 0
      %368 = vmatpush2.bf16.msra.mxu0 0
      %369 = vmatprep.subr.bf16.mxu0 0
      %370 = vmatpush2.bf16.msra.mxu0 0
      %371 = vmatprep.subr.bf16.mxu0 0
      %372 = vmatpush2.bf16.msra.mxu0 0
      %373 = vmatprep.subr.bf16.mxu0 0
      %374 = vmatpush2.bf16.msra.mxu0 0
      %375 = vmatprep.mubr.bf16.mxu0 0
      %376 = vmatmul.mubr.bf16.gmra.mxu0 %v332
      %v377 = vpop.f32.mrf.mxu0
      %v378 = vadd.f32 %v277, %v377
      %v379 = vpop.f32.mrf.mxu0
      %v380 = vadd.f32 %v279, %v379
      %v381 = vpop.f32.mrf.mxu0
      %v382 = vpop.f32.mrf.mxu0
      %383 = vdwg.mxu0
      %384 = vmatprep.subr.bf16.mxu0 0
      %385 = vmatpush1.bf16.msra.mxu0 0
      %386 = vmatprep.subr.bf16.mxu0 0
      %387 = vmatpush1.bf16.msra.mxu0 0
      %388 = vmatprep.subr.bf16.mxu0 0
      %389 = vmatpush1.bf16.msra.mxu0 0
      %390 = vmatprep.subr.bf16.mxu0 0
      %391 = vmatpush1.bf16.msra.mxu0 0
      %392 = vmatprep.subr.bf16.mxu0 0
      %393 = vmatpush1.bf16.msra.mxu0 0
      %394 = vmatprep.subr.bf16.mxu0 0
      %395 = vmatpush1.bf16.msra.mxu0 0
      %396 = vmatprep.subr.bf16.mxu0 0
      %397 = vmatpush1.bf16.msra.mxu0 0
      %398 = vmatprep.subr.bf16.mxu0 0
      %399 = vmatpush1.bf16.msra.mxu0 %v341
      %400 = vmatprep.subr.bf16.mxu0 0
      %401 = vmatpush2.bf16.msra.mxu0 0
      %402 = vmatprep.subr.bf16.mxu0 0
      %403 = vmatpush2.bf16.msra.mxu0 0
      %404 = vmatprep.subr.bf16.mxu0 0
      %405 = vmatpush2.bf16.msra.mxu0 0
      %406 = vmatprep.subr.bf16.mxu0 0
      %407 = vmatpush2.bf16.msra.mxu0 0
      %408 = vmatprep.subr.bf16.mxu0 0
      %409 = vmatpush2.bf16.msra.mxu0 0
      %410 = vmatprep.subr.bf16.mxu0 0
      %411 = vmatpush2.bf16.msra.mxu0 0
      %412 = vmatprep.subr.bf16.mxu0 0
      %413 = vmatpush2.bf16.msra.mxu0 0
      %414 = vmatprep.subr.bf16.mxu0 0
      %415 = vmatpush2.bf16.msra.mxu0 0
      %416 = vmatprep.mubr.bf16.mxu0 0
      %417 = vmatmul.mubr.bf16.gmra.mxu0 %v332
      %v418 = vpop.f32.mrf.mxu0
      %v419 = vadd.f32 %v318, %v418
      %v420 = vpop.f32.mrf.mxu0
      %v421 = vpop.f32.mrf.mxu0
      %v422 = vpop.f32.mrf.mxu0
      %423 = vdwg.mxu0
      %s424 = scalar_lea.vmem %s1, 8
      %v425 = vld [vmem:[%s424] sm:$0xf]
      %426 = vrot.lane.b32.xlu0 %v212, 126
      %v427 = vpop.permute.xlu0 %426
      %428 = vrot.lane.b32.xlu0 %v213, 126
      %v429 = vpop.permute.xlu0 %428
      %430 = vrot.lane.b32.xlu0 %v214, 126
      %v431 = vpop.permute.xlu0 %430
      %432 = vrot.lane.b32.xlu0 %v215, 126
      %v433 = vpop.permute.xlu0 %432
      %vm434 = vcmask 1031168
      %v435 = vsel %vm434, %v427, %v429
      %v436 = vsel %vm434, %v429, %v431
      %v437 = vsel %vm434, %v431, %v433
      %v439 = vsel %vm228, %v425, 0
      %v442 = vsel %vm232, %v435, 0
      %v445 = vsel %vm232, %v436, 0
      %v448 = vsel %vm232, %v437, 0
      %450 = vmatprep.subr.bf16.mxu0 0
      %451 = vmatpush1.bf16.msra.mxu0 0
      %452 = vmatprep.subr.bf16.mxu0 0
      %453 = vmatpush1.bf16.msra.mxu0 0
      %454 = vmatprep.subr.bf16.mxu0 0
      %455 = vmatpush1.bf16.msra.mxu0 0
      %456 = vmatprep.subr.bf16.mxu0 0
      %457 = vmatpush1.bf16.msra.mxu0 0
      %458 = vmatprep.subr.bf16.mxu0 0
      %459 = vmatpush1.bf16.msra.mxu0 0
      %460 = vmatprep.subr.bf16.mxu0 0
      %461 = vmatpush1.bf16.msra.mxu0 0
      %462 = vmatprep.subr.bf16.mxu0 0
      %463 = vmatpush1.bf16.msra.mxu0 0
      %464 = vmatprep.subr.bf16.mxu0 %v445
      %465 = vmatpush1.bf16.msra.mxu0 %v442
      %466 = vmatprep.subr.bf16.mxu0 0
      %467 = vmatpush2.bf16.msra.mxu0 0
      %468 = vmatprep.subr.bf16.mxu0 0
      %469 = vmatpush2.bf16.msra.mxu0 0
      %470 = vmatprep.subr.bf16.mxu0 0
      %471 = vmatpush2.bf16.msra.mxu0 0
      %472 = vmatprep.subr.bf16.mxu0 0
      %473 = vmatpush2.bf16.msra.mxu0 0
      %474 = vmatprep.subr.bf16.mxu0 0
      %475 = vmatpush2.bf16.msra.mxu0 0
      %476 = vmatprep.subr.bf16.mxu0 0
      %477 = vmatpush2.bf16.msra.mxu0 0
      %478 = vmatprep.subr.bf16.mxu0 0
      %479 = vmatpush2.bf16.msra.mxu0 0
      %480 = vmatprep.subr.bf16.mxu0 0
      %481 = vmatpush2.bf16.msra.mxu0 0
      %482 = vmatprep.mubr.bf16.mxu0 0
      %483 = vmatmul.mubr.bf16.gmra.mxu0 %v439
      %v484 = vpop.f32.mrf.mxu0
      %v485 = vadd.f32 0.0, %v484
      %v486 = vpop.f32.mrf.mxu0
      %v487 = vadd.f32 0.0, %v486
      %v488 = vpop.f32.mrf.mxu0
      %v489 = vpop.f32.mrf.mxu0
      %490 = vdwg.mxu0
      %491 = vmatprep.subr.bf16.mxu0 0
      %492 = vmatpush1.bf16.msra.mxu0 0
      %493 = vmatprep.subr.bf16.mxu0 0
      %494 = vmatpush1.bf16.msra.mxu0 0
      %495 = vmatprep.subr.bf16.mxu0 0
      %496 = vmatpush1.bf16.msra.mxu0 0
      %497 = vmatprep.subr.bf16.mxu0 0
      %498 = vmatpush1.bf16.msra.mxu0 0
      %499 = vmatprep.subr.bf16.mxu0 0
      %500 = vmatpush1.bf16.msra.mxu0 0
      %501 = vmatprep.subr.bf16.mxu0 0
      %502 = vmatpush1.bf16.msra.mxu0 0
      %503 = vmatprep.subr.bf16.mxu0 0
      %504 = vmatpush1.bf16.msra.mxu0 0
      %505 = vmatprep.subr.bf16.mxu0 0
      %506 = vmatpush1.bf16.msra.mxu0 %v448
      %507 = vmatprep.subr.bf16.mxu0 0
      %508 = vmatpush2.bf16.msra.mxu0 0
      %509 = vmatprep.subr.bf16.mxu0 0
      %510 = vmatpush2.bf16.msra.mxu0 0
      %511 = vmatprep.subr.bf16.mxu0 0
      %512 = vmatpush2.bf16.msra.mxu0 0
      %513 = vmatprep.subr.bf16.mxu0 0
      %514 = vmatpush2.bf16.msra.mxu0 0
      %515 = vmatprep.subr.bf16.mxu0 0
      %516 = vmatpush2.bf16.msra.mxu0 0
      %517 = vmatprep.subr.bf16.mxu0 0
      %518 = vmatpush2.bf16.msra.mxu0 0
      %519 = vmatprep.subr.bf16.mxu0 0
      %520 = vmatpush2.bf16.msra.mxu0 0
      %521 = vmatprep.subr.bf16.mxu0 0
      %522 = vmatpush2.bf16.msra.mxu0 0
      %523 = vmatprep.mubr.bf16.mxu0 0
      %524 = vmatmul.mubr.bf16.gmra.mxu0 %v439
      %v525 = vpop.f32.mrf.mxu0
      %v526 = vadd.f32 0.0, %v525
      %v527 = vpop.f32.mrf.mxu0
      %v528 = vpop.f32.mrf.mxu0
      %v529 = vpop.f32.mrf.mxu0
      %530 = vdwg.mxu0
      %v531 = vadd.f32 %v378, %v485
      %v532 = vadd.f32 %v380, %v487
      %v533 = vadd.f32 %v419, %v526
      %s534 = scalar_lea.vmem %s1, 12
      %v535 = vld [vmem:[%s534] sm:$0xf]
      %536 = vrot.lane.b32.xlu0 %v212, 110
      %v537 = vpop.permute.xlu0 %536
      %538 = vrot.lane.b32.xlu0 %v213, 110
      %v539 = vpop.permute.xlu0 %538
      %540 = vrot.lane.b32.xlu0 %v214, 110
      %v541 = vpop.permute.xlu0 %540
      %542 = vrot.lane.b32.xlu0 %v215, 110
      %v543 = vpop.permute.xlu0 %542
      %vm544 = vcmask 900096
      %v545 = vsel %vm544, %v537, %v539
      %v546 = vsel %vm544, %v539, %v541
      %v547 = vsel %vm544, %v541, %v543
      %v549 = vsel %vm228, %v535, 0
      %v552 = vsel %vm232, %v545, 0
      %v555 = vsel %vm232, %v546, 0
      %v558 = vsel %vm232, %v547, 0
      %560 = vmatprep.subr.bf16.mxu0 0
      %561 = vmatpush1.bf16.msra.mxu0 0
      %562 = vmatprep.subr.bf16.mxu0 0
      %563 = vmatpush1.bf16.msra.mxu0 0
      %564 = vmatprep.subr.bf16.mxu0 0
      %565 = vmatpush1.bf16.msra.mxu0 0
      %566 = vmatprep.subr.bf16.mxu0 0
      %567 = vmatpush1.bf16.msra.mxu0 0
      %568 = vmatprep.subr.bf16.mxu0 0
      %569 = vmatpush1.bf16.msra.mxu0 0
      %570 = vmatprep.subr.bf16.mxu0 0
      %571 = vmatpush1.bf16.msra.mxu0 0
      %572 = vmatprep.subr.bf16.mxu0 0
      %573 = vmatpush1.bf16.msra.mxu0 0
      %574 = vmatprep.subr.bf16.mxu0 %v555
      %575 = vmatpush1.bf16.msra.mxu0 %v552
      %576 = vmatprep.subr.bf16.mxu0 0
      %577 = vmatpush2.bf16.msra.mxu0 0
      %578 = vmatprep.subr.bf16.mxu0 0
      %579 = vmatpush2.bf16.msra.mxu0 0
      %580 = vmatprep.subr.bf16.mxu0 0
      %581 = vmatpush2.bf16.msra.mxu0 0
      %582 = vmatprep.subr.bf16.mxu0 0
      %583 = vmatpush2.bf16.msra.mxu0 0
      %584 = vmatprep.subr.bf16.mxu0 0
      %585 = vmatpush2.bf16.msra.mxu0 0
      %586 = vmatprep.subr.bf16.mxu0 0
      %587 = vmatpush2.bf16.msra.mxu0 0
      %588 = vmatprep.subr.bf16.mxu0 0
      %589 = vmatpush2.bf16.msra.mxu0 0
      %590 = vmatprep.subr.bf16.mxu0 0
      %591 = vmatpush2.bf16.msra.mxu0 0
      %592 = vmatprep.mubr.bf16.mxu0 0
      %593 = vmatmul.mubr.bf16.gmra.mxu0 %v549
      %v594 = vpop.f32.mrf.mxu0
      %v595 = vadd.f32 0.0, %v594
      %v596 = vpop.f32.mrf.mxu0
      %v597 = vadd.f32 0.0, %v596
      %v598 = vpop.f32.mrf.mxu0
      %v599 = vpop.f32.mrf.mxu0
      %600 = vdwg.mxu0
      %601 = vmatprep.subr.bf16.mxu0 0
      %602 = vmatpush1.bf16.msra.mxu0 0
      %603 = vmatprep.subr.bf16.mxu0 0
      %604 = vmatpush1.bf16.msra.mxu0 0
      %605 = vmatprep.subr.bf16.mxu0 0
      %606 = vmatpush1.bf16.msra.mxu0 0
      %607 = vmatprep.subr.bf16.mxu0 0
      %608 = vmatpush1.bf16.msra.mxu0 0
      %609 = vmatprep.subr.bf16.mxu0 0
      %610 = vmatpush1.bf16.msra.mxu0 0
      %611 = vmatprep.subr.bf16.mxu0 0
      %612 = vmatpush1.bf16.msra.mxu0 0
      %613 = vmatprep.subr.bf16.mxu0 0
      %614 = vmatpush1.bf16.msra.mxu0 0
      %615 = vmatprep.subr.bf16.mxu0 0
      %616 = vmatpush1.bf16.msra.mxu0 %v558
      %617 = vmatprep.subr.bf16.mxu0 0
      %618 = vmatpush2.bf16.msra.mxu0 0
      %619 = vmatprep.subr.bf16.mxu0 0
      %620 = vmatpush2.bf16.msra.mxu0 0
      %621 = vmatprep.subr.bf16.mxu0 0
      %622 = vmatpush2.bf16.msra.mxu0 0
      %623 = vmatprep.subr.bf16.mxu0 0
      %624 = vmatpush2.bf16.msra.mxu0 0
      %625 = vmatprep.subr.bf16.mxu0 0
      %626 = vmatpush2.bf16.msra.mxu0 0
      %627 = vmatprep.subr.bf16.mxu0 0
      %628 = vmatpush2.bf16.msra.mxu0 0
      %629 = vmatprep.subr.bf16.mxu0 0
      %630 = vmatpush2.bf16.msra.mxu0 0
      %631 = vmatprep.subr.bf16.mxu0 0
      %632 = vmatpush2.bf16.msra.mxu0 0
      %633 = vmatprep.mubr.bf16.mxu0 0
      %634 = vmatmul.mubr.bf16.gmra.mxu0 %v549
      %v635 = vpop.f32.mrf.mxu0
      %v636 = vadd.f32 0.0, %v635
      %v637 = vpop.f32.mrf.mxu0
      %v638 = vpop.f32.mrf.mxu0
      %v639 = vpop.f32.mrf.mxu0
      %640 = vdwg.mxu0
      %v641 = vadd.f32 %v531, %v595
      %v642 = vadd.f32 %v532, %v597
      %v643 = vadd.f32 %v533, %v636
      %s644 = scalar_lea.vmem %s1, 16
      %v645 = vld [vmem:[%s644] sm:$0xf]
      %646 = vrot.lane.b32.xlu0 %v212, 109
      %v647 = vpop.permute.xlu0 %646
      %648 = vrot.lane.b32.xlu0 %v213, 109
      %v649 = vpop.permute.xlu0 %648
      %650 = vrot.lane.b32.xlu0 %v214, 109
      %v651 = vpop.permute.xlu0 %650
      %652 = vrot.lane.b32.xlu0 %v215, 109
      %v653 = vpop.permute.xlu0 %652
      %vm654 = vcmask 891904
      %v655 = vsel %vm654, %v647, %v649
      %v656 = vsel %vm654, %v649, %v651
      %v657 = vsel %vm654, %v651, %v653
      %v659 = vsel %vm228, %v645, 0
      %v662 = vsel %vm232, %v655, 0
      %v665 = vsel %vm232, %v656, 0
      %v668 = vsel %vm232, %v657, 0
      %670 = vmatprep.subr.bf16.mxu0 0
      %671 = vmatpush1.bf16.msra.mxu0 0
      %672 = vmatprep.subr.bf16.mxu0 0
      %673 = vmatpush1.bf16.msra.mxu0 0
      %674 = vmatprep.subr.bf16.mxu0 0
      %675 = vmatpush1.bf16.msra.mxu0 0
      %676 = vmatprep.subr.bf16.mxu0 0
      %677 = vmatpush1.bf16.msra.mxu0 0
      %678 = vmatprep.subr.bf16.mxu0 0
      %679 = vmatpush1.bf16.msra.mxu0 0
      %680 = vmatprep.subr.bf16.mxu0 0
      %681 = vmatpush1.bf16.msra.mxu0 0
      %682 = vmatprep.subr.bf16.mxu0 0
      %683 = vmatpush1.bf16.msra.mxu0 0
      %684 = vmatprep.subr.bf16.mxu0 %v665
      %685 = vmatpush1.bf16.msra.mxu0 %v662
      %686 = vmatprep.subr.bf16.mxu0 0
      %687 = vmatpush2.bf16.msra.mxu0 0
      %688 = vmatprep.subr.bf16.mxu0 0
      %689 = vmatpush2.bf16.msra.mxu0 0
      %690 = vmatprep.subr.bf16.mxu0 0
      %691 = vmatpush2.bf16.msra.mxu0 0
      %692 = vmatprep.subr.bf16.mxu0 0
      %693 = vmatpush2.bf16.msra.mxu0 0
      %694 = vmatprep.subr.bf16.mxu0 0
      %695 = vmatpush2.bf16.msra.mxu0 0
      %696 = vmatprep.subr.bf16.mxu0 0
      %697 = vmatpush2.bf16.msra.mxu0 0
      %698 = vmatprep.subr.bf16.mxu0 0
      %699 = vmatpush2.bf16.msra.mxu0 0
      %700 = vmatprep.subr.bf16.mxu0 0
      %701 = vmatpush2.bf16.msra.mxu0 0
      %702 = vmatprep.mubr.bf16.mxu0 0
      %703 = vmatmul.mubr.bf16.gmra.mxu0 %v659
      %v704 = vpop.f32.mrf.mxu0
      %v705 = vadd.f32 0.0, %v704
      %v706 = vpop.f32.mrf.mxu0
      %v707 = vadd.f32 0.0, %v706
      %v708 = vpop.f32.mrf.mxu0
      %v709 = vpop.f32.mrf.mxu0
      %710 = vdwg.mxu0
      %711 = vmatprep.subr.bf16.mxu0 0
      %712 = vmatpush1.bf16.msra.mxu0 0
      %713 = vmatprep.subr.bf16.mxu0 0
      %714 = vmatpush1.bf16.msra.mxu0 0
      %715 = vmatprep.subr.bf16.mxu0 0
      %716 = vmatpush1.bf16.msra.mxu0 0
      %717 = vmatprep.subr.bf16.mxu0 0
      %718 = vmatpush1.bf16.msra.mxu0 0
      %719 = vmatprep.subr.bf16.mxu0 0
      %720 = vmatpush1.bf16.msra.mxu0 0
      %721 = vmatprep.subr.bf16.mxu0 0
      %722 = vmatpush1.bf16.msra.mxu0 0
      %723 = vmatprep.subr.bf16.mxu0 0
      %724 = vmatpush1.bf16.msra.mxu0 0
      %725 = vmatprep.subr.bf16.mxu0 0
      %726 = vmatpush1.bf16.msra.mxu0 %v668
      %727 = vmatprep.subr.bf16.mxu0 0
      %728 = vmatpush2.bf16.msra.mxu0 0
      %729 = vmatprep.subr.bf16.mxu0 0
      %730 = vmatpush2.bf16.msra.mxu0 0
      %731 = vmatprep.subr.bf16.mxu0 0
      %732 = vmatpush2.bf16.msra.mxu0 0
      %733 = vmatprep.subr.bf16.mxu0 0
      %734 = vmatpush2.bf16.msra.mxu0 0
      %735 = vmatprep.subr.bf16.mxu0 0
      %736 = vmatpush2.bf16.msra.mxu0 0
      %737 = vmatprep.subr.bf16.mxu0 0
      %738 = vmatpush2.bf16.msra.mxu0 0
      %739 = vmatprep.subr.bf16.mxu0 0
      %740 = vmatpush2.bf16.msra.mxu0 0
      %741 = vmatprep.subr.bf16.mxu0 0
      %742 = vmatpush2.bf16.msra.mxu0 0
      %743 = vmatprep.mubr.bf16.mxu0 0
      %744 = vmatmul.mubr.bf16.gmra.mxu0 %v659
      %v745 = vpop.f32.mrf.mxu0
      %v746 = vadd.f32 0.0, %v745
      %v747 = vpop.f32.mrf.mxu0
      %v748 = vpop.f32.mrf.mxu0
      %v749 = vpop.f32.mrf.mxu0
      %750 = vdwg.mxu0
      %v751 = vadd.f32 %v641, %v705
      %v752 = vadd.f32 %v642, %v707
      %v753 = vadd.f32 %v643, %v746
      %s754 = scalar_lea.vmem %s1, 20
      %v755 = vld [vmem:[%s754] sm:$0xf]
      %756 = vrot.lane.b32.xlu0 %v212, 108
      %v757 = vpop.permute.xlu0 %756
      %758 = vrot.lane.b32.xlu0 %v213, 108
      %v759 = vpop.permute.xlu0 %758
      %760 = vrot.lane.b32.xlu0 %v214, 108
      %v761 = vpop.permute.xlu0 %760
      %762 = vrot.lane.b32.xlu0 %v215, 108
      %v763 = vpop.permute.xlu0 %762
      %vm764 = vcmask 883712
      %v765 = vsel %vm764, %v757, %v759
      %v766 = vsel %vm764, %v759, %v761
      %v767 = vsel %vm764, %v761, %v763
      %v769 = vsel %vm228, %v755, 0
      %v772 = vsel %vm232, %v765, 0
      %v775 = vsel %vm232, %v766, 0
      %v778 = vsel %vm232, %v767, 0
      %780 = vmatprep.subr.bf16.mxu0 0
      %781 = vmatpush1.bf16.msra.mxu0 0
      %782 = vmatprep.subr.bf16.mxu0 0
      %783 = vmatpush1.bf16.msra.mxu0 0
      %784 = vmatprep.subr.bf16.mxu0 0
      %785 = vmatpush1.bf16.msra.mxu0 0
      %786 = vmatprep.subr.bf16.mxu0 0
      %787 = vmatpush1.bf16.msra.mxu0 0
      %788 = vmatprep.subr.bf16.mxu0 0
      %789 = vmatpush1.bf16.msra.mxu0 0
      %790 = vmatprep.subr.bf16.mxu0 0
      %791 = vmatpush1.bf16.msra.mxu0 0
      %792 = vmatprep.subr.bf16.mxu0 0
      %793 = vmatpush1.bf16.msra.mxu0 0
      %794 = vmatprep.subr.bf16.mxu0 %v775
      %795 = vmatpush1.bf16.msra.mxu0 %v772
      %796 = vmatprep.subr.bf16.mxu0 0
      %797 = vmatpush2.bf16.msra.mxu0 0
      %798 = vmatprep.subr.bf16.mxu0 0
      %799 = vmatpush2.bf16.msra.mxu0 0
      %800 = vmatprep.subr.bf16.mxu0 0
      %801 = vmatpush2.bf16.msra.mxu0 0
      %802 = vmatprep.subr.bf16.mxu0 0
      %803 = vmatpush2.bf16.msra.mxu0 0
      %804 = vmatprep.subr.bf16.mxu0 0
      %805 = vmatpush2.bf16.msra.mxu0 0
      %806 = vmatprep.subr.bf16.mxu0 0
      %807 = vmatpush2.bf16.msra.mxu0 0
      %808 = vmatprep.subr.bf16.mxu0 0
      %809 = vmatpush2.bf16.msra.mxu0 0
      %810 = vmatprep.subr.bf16.mxu0 0
      %811 = vmatpush2.bf16.msra.mxu0 0
      %812 = vmatprep.mubr.bf16.mxu0 0
      %813 = vmatmul.mubr.bf16.gmra.mxu0 %v769
      %v814 = vpop.f32.mrf.mxu0
      %v815 = vadd.f32 0.0, %v814
      %v816 = vpop.f32.mrf.mxu0
      %v817 = vadd.f32 0.0, %v816
      %v818 = vpop.f32.mrf.mxu0
      %v819 = vpop.f32.mrf.mxu0
      %820 = vdwg.mxu0
      %821 = vmatprep.subr.bf16.mxu0 0
      %822 = vmatpush1.bf16.msra.mxu0 0
      %823 = vmatprep.subr.bf16.mxu0 0
      %824 = vmatpush1.bf16.msra.mxu0 0
      %825 = vmatprep.subr.bf16.mxu0 0
      %826 = vmatpush1.bf16.msra.mxu0 0
      %827 = vmatprep.subr.bf16.mxu0 0
      %828 = vmatpush1.bf16.msra.mxu0 0
      %829 = vmatprep.subr.bf16.mxu0 0
      %830 = vmatpush1.bf16.msra.mxu0 0
      %831 = vmatprep.subr.bf16.mxu0 0
      %832 = vmatpush1.bf16.msra.mxu0 0
      %833 = vmatprep.subr.bf16.mxu0 0
      %834 = vmatpush1.bf16.msra.mxu0 0
      %835 = vmatprep.subr.bf16.mxu0 0
      %836 = vmatpush1.bf16.msra.mxu0 %v778
      %837 = vmatprep.subr.bf16.mxu0 0
      %838 = vmatpush2.bf16.msra.mxu0 0
      %839 = vmatprep.subr.bf16.mxu0 0
      %840 = vmatpush2.bf16.msra.mxu0 0
      %841 = vmatprep.subr.bf16.mxu0 0
      %842 = vmatpush2.bf16.msra.mxu0 0
      %843 = vmatprep.subr.bf16.mxu0 0
      %844 = vmatpush2.bf16.msra.mxu0 0
      %845 = vmatprep.subr.bf16.mxu0 0
      %846 = vmatpush2.bf16.msra.mxu0 0
      %847 = vmatprep.subr.bf16.mxu0 0
      %848 = vmatpush2.bf16.msra.mxu0 0
      %849 = vmatprep.subr.bf16.mxu0 0
      %850 = vmatpush2.bf16.msra.mxu0 0
      %851 = vmatprep.subr.bf16.mxu0 0
      %852 = vmatpush2.bf16.msra.mxu0 0
      %853 = vmatprep.mubr.bf16.mxu0 0
      %854 = vmatmul.mubr.bf16.gmra.mxu0 %v769
      %v855 = vpop.f32.mrf.mxu0
      %v856 = vadd.f32 0.0, %v855
      %v857 = vpop.f32.mrf.mxu0
      %v858 = vpop.f32.mrf.mxu0
      %v859 = vpop.f32.mrf.mxu0
      %860 = vdwg.mxu0
      %v861 = vadd.f32 %v751, %v815
      %v862 = vadd.f32 %v752, %v817
      %v863 = vadd.f32 %v753, %v856
      %s864 = scalar_lea.vmem %s1, 24
      %v865 = vld [vmem:[%s864] sm:$0xf]
      %866 = vrot.lane.b32.xlu0 %v212, 92
      %v867 = vpop.permute.xlu0 %866
      %868 = vrot.lane.b32.xlu0 %v213, 92
      %v869 = vpop.permute.xlu0 %868
      %870 = vrot.lane.b32.xlu0 %v214, 92
      %v871 = vpop.permute.xlu0 %870
      %872 = vrot.lane.b32.xlu0 %v215, 92
      %v873 = vpop.permute.xlu0 %872
      %vm874 = vcmask 752640
      %v875 = vsel %vm874, %v867, %v869
      %v876 = vsel %vm874, %v869, %v871
      %v877 = vsel %vm874, %v871, %v873
      %v879 = vsel %vm228, %v865, 0
      %v882 = vsel %vm232, %v875, 0
      %v885 = vsel %vm232, %v876, 0
      %v888 = vsel %vm232, %v877, 0
      %890 = vmatprep.subr.bf16.mxu0 0
      %891 = vmatpush1.bf16.msra.mxu0 0
      %892 = vmatprep.subr.bf16.mxu0 0
      %893 = vmatpush1.bf16.msra.mxu0 0
      %894 = vmatprep.subr.bf16.mxu0 0
      %895 = vmatpush1.bf16.msra.mxu0 0
      %896 = vmatprep.subr.bf16.mxu0 0
      %897 = vmatpush1.bf16.msra.mxu0 0
      %898 = vmatprep.subr.bf16.mxu0 0
      %899 = vmatpush1.bf16.msra.mxu0 0
      %900 = vmatprep.subr.bf16.mxu0 0
      %901 = vmatpush1.bf16.msra.mxu0 0
      %902 = vmatprep.subr.bf16.mxu0 0
      %903 = vmatpush1.bf16.msra.mxu0 0
      %904 = vmatprep.subr.bf16.mxu0 %v885
      %905 = vmatpush1.bf16.msra.mxu0 %v882
      %906 = vmatprep.subr.bf16.mxu0 0
      %907 = vmatpush2.bf16.msra.mxu0 0
      %908 = vmatprep.subr.bf16.mxu0 0
      %909 = vmatpush2.bf16.msra.mxu0 0
      %910 = vmatprep.subr.bf16.mxu0 0
      %911 = vmatpush2.bf16.msra.mxu0 0
      %912 = vmatprep.subr.bf16.mxu0 0
      %913 = vmatpush2.bf16.msra.mxu0 0
      %914 = vmatprep.subr.bf16.mxu0 0
      %915 = vmatpush2.bf16.msra.mxu0 0
      %916 = vmatprep.subr.bf16.mxu0 0
      %917 = vmatpush2.bf16.msra.mxu0 0
      %918 = vmatprep.subr.bf16.mxu0 0
      %919 = vmatpush2.bf16.msra.mxu0 0
      %920 = vmatprep.subr.bf16.mxu0 0
      %921 = vmatpush2.bf16.msra.mxu0 0
      %922 = vmatprep.mubr.bf16.mxu0 0
      %923 = vmatmul.mubr.bf16.gmra.mxu0 %v879
      %v924 = vpop.f32.mrf.mxu0
      %v925 = vadd.f32 0.0, %v924
      %v926 = vpop.f32.mrf.mxu0
      %v927 = vadd.f32 0.0, %v926
      %v928 = vpop.f32.mrf.mxu0
      %v929 = vpop.f32.mrf.mxu0
      %930 = vdwg.mxu0
      %931 = vmatprep.subr.bf16.mxu0 0
      %932 = vmatpush1.bf16.msra.mxu0 0
      %933 = vmatprep.subr.bf16.mxu0 0
      %934 = vmatpush1.bf16.msra.mxu0 0
      %935 = vmatprep.subr.bf16.mxu0 0
      %936 = vmatpush1.bf16.msra.mxu0 0
      %937 = vmatprep.subr.bf16.mxu0 0
      %938 = vmatpush1.bf16.msra.mxu0 0
      %939 = vmatprep.subr.bf16.mxu0 0
      %940 = vmatpush1.bf16.msra.mxu0 0
      %941 = vmatprep.subr.bf16.mxu0 0
      %942 = vmatpush1.bf16.msra.mxu0 0
      %943 = vmatprep.subr.bf16.mxu0 0
      %944 = vmatpush1.bf16.msra.mxu0 0
      %945 = vmatprep.subr.bf16.mxu0 0
      %946 = vmatpush1.bf16.msra.mxu0 %v888
      %947 = vmatprep.subr.bf16.mxu0 0
      %948 = vmatpush2.bf16.msra.mxu0 0
      %949 = vmatprep.subr.bf16.mxu0 0
      %950 = vmatpush2.bf16.msra.mxu0 0
      %951 = vmatprep.subr.bf16.mxu0 0
      %952 = vmatpush2.bf16.msra.mxu0 0
      %953 = vmatprep.subr.bf16.mxu0 0
      %954 = vmatpush2.bf16.msra.mxu0 0
      %955 = vmatprep.subr.bf16.mxu0 0
      %956 = vmatpush2.bf16.msra.mxu0 0
      %957 = vmatprep.subr.bf16.mxu0 0
      %958 = vmatpush2.bf16.msra.mxu0 0
      %959 = vmatprep.subr.bf16.mxu0 0
      %960 = vmatpush2.bf16.msra.mxu0 0
      %961 = vmatprep.subr.bf16.mxu0 0
      %962 = vmatpush2.bf16.msra.mxu0 0
      %963 = vmatprep.mubr.bf16.mxu0 0
      %964 = vmatmul.mubr.bf16.gmra.mxu0 %v879
      %v965 = vpop.f32.mrf.mxu0
      %v966 = vadd.f32 0.0, %v965
      %v967 = vpop.f32.mrf.mxu0
      %v968 = vpop.f32.mrf.mxu0
      %v969 = vpop.f32.mrf.mxu0
      %970 = vdwg.mxu0
      %v971 = vadd.f32 %v861, %v925
      %v972 = vadd.f32 %v862, %v927
      %v973 = vadd.f32 %v863, %v966
      %s974 = scalar_lea.vmem %s1, 28
      %v975 = vld [vmem:[%s974] sm:$0xf]
      %976 = vrot.lane.b32.xlu0 %v212, 91
      %v977 = vpop.permute.xlu0 %976
      %978 = vrot.lane.b32.xlu0 %v213, 91
      %v979 = vpop.permute.xlu0 %978
      %980 = vrot.lane.b32.xlu0 %v214, 91
      %v981 = vpop.permute.xlu0 %980
      %982 = vrot.lane.b32.xlu0 %v215, 91
      %v983 = vpop.permute.xlu0 %982
      %vm984 = vcmask 744448
      %v985 = vsel %vm984, %v977, %v979
      %v986 = vsel %vm984, %v979, %v981
      %v987 = vsel %vm984, %v981, %v983
      %v989 = vsel %vm228, %v975, 0
      %v992 = vsel %vm232, %v985, 0
      %v995 = vsel %vm232, %v986, 0
      %v998 = vsel %vm232, %v987, 0
      %1000 = vmatprep.subr.bf16.mxu0 0
      %1001 = vmatpush1.bf16.msra.mxu0 0
      %1002 = vmatprep.subr.bf16.mxu0 0
      %1003 = vmatpush1.bf16.msra.mxu0 0
      %1004 = vmatprep.subr.bf16.mxu0 0
      %1005 = vmatpush1.bf16.msra.mxu0 0
      %1006 = vmatprep.subr.bf16.mxu0 0
      %1007 = vmatpush1.bf16.msra.mxu0 0
      %1008 = vmatprep.subr.bf16.mxu0 0
      %1009 = vmatpush1.bf16.msra.mxu0 0
      %1010 = vmatprep.subr.bf16.mxu0 0
      %1011 = vmatpush1.bf16.msra.mxu0 0
      %1012 = vmatprep.subr.bf16.mxu0 0
      %1013 = vmatpush1.bf16.msra.mxu0 0
      %1014 = vmatprep.subr.bf16.mxu0 %v995
      %1015 = vmatpush1.bf16.msra.mxu0 %v992
      %1016 = vmatprep.subr.bf16.mxu0 0
      %1017 = vmatpush2.bf16.msra.mxu0 0
      %1018 = vmatprep.subr.bf16.mxu0 0
      %1019 = vmatpush2.bf16.msra.mxu0 0
      %1020 = vmatprep.subr.bf16.mxu0 0
      %1021 = vmatpush2.bf16.msra.mxu0 0
      %1022 = vmatprep.subr.bf16.mxu0 0
      %1023 = vmatpush2.bf16.msra.mxu0 0
      %1024 = vmatprep.subr.bf16.mxu0 0
      %1025 = vmatpush2.bf16.msra.mxu0 0
      %1026 = vmatprep.subr.bf16.mxu0 0
      %1027 = vmatpush2.bf16.msra.mxu0 0
      %1028 = vmatprep.subr.bf16.mxu0 0
      %1029 = vmatpush2.bf16.msra.mxu0 0
      %1030 = vmatprep.subr.bf16.mxu0 0
      %1031 = vmatpush2.bf16.msra.mxu0 0
      %1032 = vmatprep.mubr.bf16.mxu0 0
      %1033 = vmatmul.mubr.bf16.gmra.mxu0 %v989
      %v1034 = vpop.f32.mrf.mxu0
      %v1035 = vadd.f32 0.0, %v1034
      %v1036 = vpop.f32.mrf.mxu0
      %v1037 = vadd.f32 0.0, %v1036
      %v1038 = vpop.f32.mrf.mxu0
      %v1039 = vpop.f32.mrf.mxu0
      %1040 = vdwg.mxu0
      %1041 = vmatprep.subr.bf16.mxu0 0
      %1042 = vmatpush1.bf16.msra.mxu0 0
      %1043 = vmatprep.subr.bf16.mxu0 0
      %1044 = vmatpush1.bf16.msra.mxu0 0
      %1045 = vmatprep.subr.bf16.mxu0 0
      %1046 = vmatpush1.bf16.msra.mxu0 0
      %1047 = vmatprep.subr.bf16.mxu0 0
      %1048 = vmatpush1.bf16.msra.mxu0 0
      %1049 = vmatprep.subr.bf16.mxu0 0
      %1050 = vmatpush1.bf16.msra.mxu0 0
      %1051 = vmatprep.subr.bf16.mxu0 0
      %1052 = vmatpush1.bf16.msra.mxu0 0
      %1053 = vmatprep.subr.bf16.mxu0 0
      %1054 = vmatpush1.bf16.msra.mxu0 0
      %1055 = vmatprep.subr.bf16.mxu0 0
      %1056 = vmatpush1.bf16.msra.mxu0 %v998
      %1057 = vmatprep.subr.bf16.mxu0 0
      %1058 = vmatpush2.bf16.msra.mxu0 0
      %1059 = vmatprep.subr.bf16.mxu0 0
      %1060 = vmatpush2.bf16.msra.mxu0 0
      %1061 = vmatprep.subr.bf16.mxu0 0
      %1062 = vmatpush2.bf16.msra.mxu0 0
      %1063 = vmatprep.subr.bf16.mxu0 0
      %1064 = vmatpush2.bf16.msra.mxu0 0
      %1065 = vmatprep.subr.bf16.mxu0 0
      %1066 = vmatpush2.bf16.msra.mxu0 0
      %1067 = vmatprep.subr.bf16.mxu0 0
      %1068 = vmatpush2.bf16.msra.mxu0 0
      %1069 = vmatprep.subr.bf16.mxu0 0
      %1070 = vmatpush2.bf16.msra.mxu0 0
      %1071 = vmatprep.subr.bf16.mxu0 0
      %1072 = vmatpush2.bf16.msra.mxu0 0
      %1073 = vmatprep.mubr.bf16.mxu0 0
      %1074 = vmatmul.mubr.bf16.gmra.mxu0 %v989
      %v1075 = vpop.f32.mrf.mxu0
      %v1076 = vadd.f32 0.0, %v1075
      %v1077 = vpop.f32.mrf.mxu0
      %v1078 = vpop.f32.mrf.mxu0
      %v1079 = vpop.f32.mrf.mxu0
      %1080 = vdwg.mxu0
      %v1081 = vadd.f32 %v971, %v1035
      %v1082 = vadd.f32 %v972, %v1037
      %v1083 = vadd.f32 %v973, %v1076
      %s1084 = scalar_lea.vmem %s1, 32
      %v1085 = vld [vmem:[%s1084] sm:$0xf]
      %1086 = vrot.lane.b32.xlu0 %v212, 90
      %v1087 = vpop.permute.xlu0 %1086
      %1088 = vrot.lane.b32.xlu0 %v213, 90
      %v1089 = vpop.permute.xlu0 %1088
      %1090 = vrot.lane.b32.xlu0 %v214, 90
      %v1091 = vpop.permute.xlu0 %1090
      %1092 = vrot.lane.b32.xlu0 %v215, 90
      %v1093 = vpop.permute.xlu0 %1092
      %vm1094 = vcmask 736256
      %v1095 = vsel %vm1094, %v1087, %v1089
      %v1096 = vsel %vm1094, %v1089, %v1091
      %v1097 = vsel %vm1094, %v1091, %v1093
      %v1099 = vsel %vm228, %v1085, 0
      %v1102 = vsel %vm232, %v1095, 0
      %v1105 = vsel %vm232, %v1096, 0
      %v1108 = vsel %vm232, %v1097, 0
      %1110 = vmatprep.subr.bf16.mxu0 0
      %1111 = vmatpush1.bf16.msra.mxu0 0
      %1112 = vmatprep.subr.bf16.mxu0 0
      %1113 = vmatpush1.bf16.msra.mxu0 0
      %1114 = vmatprep.subr.bf16.mxu0 0
      %1115 = vmatpush1.bf16.msra.mxu0 0
      %1116 = vmatprep.subr.bf16.mxu0 0
      %1117 = vmatpush1.bf16.msra.mxu0 0
      %1118 = vmatprep.subr.bf16.mxu0 0
      %1119 = vmatpush1.bf16.msra.mxu0 0
      %1120 = vmatprep.subr.bf16.mxu0 0
      %1121 = vmatpush1.bf16.msra.mxu0 0
      %1122 = vmatprep.subr.bf16.mxu0 0
      %1123 = vmatpush1.bf16.msra.mxu0 0
      %1124 = vmatprep.subr.bf16.mxu0 %v1105
      %1125 = vmatpush1.bf16.msra.mxu0 %v1102
      %1126 = vmatprep.subr.bf16.mxu0 0
      %1127 = vmatpush2.bf16.msra.mxu0 0
      %1128 = vmatprep.subr.bf16.mxu0 0
      %1129 = vmatpush2.bf16.msra.mxu0 0
      %1130 = vmatprep.subr.bf16.mxu0 0
      %1131 = vmatpush2.bf16.msra.mxu0 0
      %1132 = vmatprep.subr.bf16.mxu0 0
      %1133 = vmatpush2.bf16.msra.mxu0 0
      %1134 = vmatprep.subr.bf16.mxu0 0
      %1135 = vmatpush2.bf16.msra.mxu0 0
      %1136 = vmatprep.subr.bf16.mxu0 0
      %1137 = vmatpush2.bf16.msra.mxu0 0
      %1138 = vmatprep.subr.bf16.mxu0 0
      %1139 = vmatpush2.bf16.msra.mxu0 0
      %1140 = vmatprep.subr.bf16.mxu0 0
      %1141 = vmatpush2.bf16.msra.mxu0 0
      %1142 = vmatprep.mubr.bf16.mxu0 0
      %1143 = vmatmul.mubr.bf16.gmra.mxu0 %v1099
      %v1144 = vpop.f32.mrf.mxu0
      %v1145 = vadd.f32 0.0, %v1144
      %v1146 = vpop.f32.mrf.mxu0
      %v1147 = vadd.f32 0.0, %v1146
      %v1148 = vpop.f32.mrf.mxu0
      %v1149 = vpop.f32.mrf.mxu0
      %1150 = vdwg.mxu0
      %1151 = vmatprep.subr.bf16.mxu0 0
      %1152 = vmatpush1.bf16.msra.mxu0 0
      %1153 = vmatprep.subr.bf16.mxu0 0
      %1154 = vmatpush1.bf16.msra.mxu0 0
      %1155 = vmatprep.subr.bf16.mxu0 0
      %1156 = vmatpush1.bf16.msra.mxu0 0
      %1157 = vmatprep.subr.bf16.mxu0 0
      %1158 = vmatpush1.bf16.msra.mxu0 0
      %1159 = vmatprep.subr.bf16.mxu0 0
      %1160 = vmatpush1.bf16.msra.mxu0 0
      %1161 = vmatprep.subr.bf16.mxu0 0
      %1162 = vmatpush1.bf16.msra.mxu0 0
      %1163 = vmatprep.subr.bf16.mxu0 0
      %1164 = vmatpush1.bf16.msra.mxu0 0
      %1165 = vmatprep.subr.bf16.mxu0 0
      %1166 = vmatpush1.bf16.msra.mxu0 %v1108
      %1167 = vmatprep.subr.bf16.mxu0 0
      %1168 = vmatpush2.bf16.msra.mxu0 0
      %1169 = vmatprep.subr.bf16.mxu0 0
      %1170 = vmatpush2.bf16.msra.mxu0 0
      %1171 = vmatprep.subr.bf16.mxu0 0
      %1172 = vmatpush2.bf16.msra.mxu0 0
      %1173 = vmatprep.subr.bf16.mxu0 0
      %1174 = vmatpush2.bf16.msra.mxu0 0
      %1175 = vmatprep.subr.bf16.mxu0 0
      %1176 = vmatpush2.bf16.msra.mxu0 0
      %1177 = vmatprep.subr.bf16.mxu0 0
      %1178 = vmatpush2.bf16.msra.mxu0 0
      %1179 = vmatprep.subr.bf16.mxu0 0
      %1180 = vmatpush2.bf16.msra.mxu0 0
      %1181 = vmatprep.subr.bf16.mxu0 0
      %1182 = vmatpush2.bf16.msra.mxu0 0
      %1183 = vmatprep.mubr.bf16.mxu0 0
      %1184 = vmatmul.mubr.bf16.gmra.mxu0 %v1099
      %v1185 = vpop.f32.mrf.mxu0
      %v1186 = vadd.f32 0.0, %v1185
      %v1187 = vpop.f32.mrf.mxu0
      %v1188 = vpop.f32.mrf.mxu0
      %v1189 = vpop.f32.mrf.mxu0
      %1190 = vdwg.mxu0
      %v1191 = vadd.f32 %v1081, %v1145
      %v1192 = vadd.f32 %v1082, %v1147
      %v1193 = vadd.f32 %v1083, %v1186
      %v1194 = vld [vmem:[%s2] sm:$0xff]
      %1196 = vset.pattern.permute.xlu0 0
      %1197 = vperm.xlu0 %1196, %v1194
      %v1198 = vpop.permute.xlu0 %1197
      %v1200 = vmul.f32 %v1191, %v1198
      %v1201 = vmul.f32 %v1192, %v1198
      %v1202 = vmul.f32 %v1193, %v1198
      %v1203 = vld [vmem:[%s3] sm:$0xff]
      %1205 = vset.pattern.permute.xlu0 0
      %1206 = vperm.xlu0 %1205, %v1203
      %v1207 = vpop.permute.xlu0 %1206
      %v1209 = vadd.f32 %v1200, %v1207
      %v1210 = vadd.f32 %v1201, %v1207
      %v1211 = vadd.f32 %v1202, %v1207
      %v1212 = vmax.f32 %v1209, 0.0
      %v1213 = vmax.f32 %v1210, 0.0
      %v1214 = vmax.f32 %v1211, 0.0
      %1215 = vst [vmem:[%s197] sm:$0xff] %v1212
      %1216 = vst [vmem:[%s197 + $0x8] sm:$0xff] %v1213
      %1217 = vst [vmem:[%s197 + $0x10] sm:$0xff] %v1214
      %p1218 = scmp.lt.s32.totalorder %s15, 1
      %s1219 = scalar_select %p1218, %s15, 1
      %s1220 = smul.addr %s1219, 3
      %s1221 = smul.addr %s1220, 8
      %s1222 = scalar_lea.vmem %s4, %s1221
      // Predicated region
      $region37: #{conv_bn_relu_forward.3} parent=35 // pred_check
        %p1223 = pneg %p122
      $region38: #{conv_bn_relu_forward.3} parent=35 // pred_check_branch
        %1225 = sbr.rel (%p1223) target = $region40
      $region39: #{conv_bn_relu_forward.3} parent=35 // pred_region
        _
      $region40: #{conv_bn_relu_forward.3} parent=35 // pred_fallthru
        _
    $region36: #{conv_bn_relu_forward.3} parent=5 // pred_fallthru
      _
    %p1226 = scmp.le.s32.totalorder 2, %s10
    // Predicated region
    $region41: #{conv_bn_relu_forward.3} parent=5 // pred_check
      %p1227 = pneg %p1226
    $region42: #{conv_bn_relu_forward.3} parent=5 // pred_check_branch
      %1229 = sbr.rel (%p1227) target = $region44
    $region43: #{conv_bn_relu_forward.3} parent=5 // pred_region
      %s1230 = ssub.s32 %s10, 2
      // Predicated region
      $region45: #{conv_bn_relu_forward.3} parent=43 // pred_check
        %p1231 = pneg %p128
      $region46: #{conv_bn_relu_forward.3} parent=43 // pred_check_branch
        %1233 = sbr.rel (%p1231) target = $region48
      $region47: #{conv_bn_relu_forward.3} parent=43 // pred_region
        %p1234 = scmp.lt.s32.totalorder %s16, 1
        %s1235 = scalar_select %p1234, %s16, 1
        %s1236 = smul.addr %s1235, 3
        %s1237 = smul.addr %s1236, 8
        %s1238 = scalar_lea.vmem %s4, %s1237
      $region48: #{conv_bn_relu_forward.3} parent=43 // pred_fallthru
        _
    $region44: #{conv_bn_relu_forward.3} parent=5 // pred_fallthru
      _
  $region6: #{conv_bn_relu_forward.3} parent=0 // loop_footer
    %s14 = sadd.s32 1, %s10
  $region7: #{conv_bn_relu_forward.3} parent=0 // loop_footer_branch
    %9 = sbr.rel target = $region3
  $region8: #{conv_bn_relu_forward.3} parent=0 // loop_exit
    _

</llo_original>
